<compile_context>
chip_gen: v6e
topology: v6e:2x2x1
jax: 0.10.0
libtpu: 0.0.40
codegen_flags: <defaults>
</compile_context>

<pallas_src>
import math
import numpy as np
import jax
import jax.numpy as jnp
from jax import lax
from jax.scipy.special import erf
from jax.experimental import pallas as pl
from jax.experimental.pallas import tpu as pltpu

SQRT_PI = math.sqrt(math.pi)
TANH1_CUBED = float(np.tanh(1.0) ** 3)
VMEM_LIMIT_BYTES = 32 * 1024 * 1024          # raise scoped VMEM (16 MiB default on v5e)


# -----------------------------------------------------------------------------
# BlockSpec helpers
# -----------------------------------------------------------------------------
def _full_spec(shape):
    zeros = (0,) * len(shape)
    return pl.BlockSpec(tuple(shape), lambda *_: zeros)


def _row_spec(row_tile, ncols):
    return pl.BlockSpec((row_tile, ncols), lambda i: (i, 0))


# -----------------------------------------------------------------------------
# fused MACE core kernel: embedding + L x (interaction, product, readout)
#                         + kappa readout + per-graph scatter, in ONE call
# -----------------------------------------------------------------------------
def make_mace_core_kernel(num_layers, inv_avg, slab_cols):
    def kernel(*refs):
        (attrs_ref, ef_ref, send_ref, recv_ref, boh_ref,
         ae_ref, wemb_ref, wkap_ref) = refs[:8]
        pos = 8
        layer_w = []
        for _ in range(num_layers):
            layer_w.append(refs[pos:pos + 4]); pos += 4
        read_w = []
        for l in range(num_layers):
            if l == num_layers - 1:
                read_w.append(refs[pos:pos + 2]); pos += 2
            else:
                read_w.append(refs[pos:pos + 1]); pos += 1
        nf_out, nslab_out, gslab_out = refs[pos], refs[pos + 1], refs[pos + 2]

        attrs = attrs_ref[...]                     # [N, T] one-hot
        send = send_ref[...]                       # [E, N] (loaded once, reused per layer)
        recv = recv_ref[...]                       # [N, E]
        ef = ef_ref[...]                           # [E, B]

        node_e0 = jnp.dot(attrs, ae_ref[...], preferred_element_type=jnp.float32)
        node_feats = jnp.dot(attrs, wemb_ref[...], preferred_element_type=jnp.float32)

        scalar_cols = [node_e0]
        for l in range(num_layers):
            w_rad, w_mix, w_sc, w_prod = layer_w[l]
            # TODO(synk): e3nn InteractionBlock / EquivariantProductBasisBlock code
            # not provided; linear surrogate keeps the dataflow (radial weighting,
            # gather at sender, aggregate at receiver, linear mix, skip connection).
            gathered = jnp.dot(send, node_feats, preferred_element_type=jnp.float32)
            radial = jnp.dot(ef, w_rad[...], preferred_element_type=jnp.float32)
            msgs = gathered * radial
            agg = jnp.dot(recv, msgs, preferred_element_type=jnp.float32) * inv_avg
            nf = jnp.dot(agg, w_mix[...], preferred_element_type=jnp.float32)
            sc = jnp.dot(node_feats, w_sc[...], preferred_element_type=jnp.float32)
            node_feats = jnp.dot(nf, w_prod[...], preferred_element_type=jnp.float32) + sc
            if l == num_layers - 1:
                w1, w2 = read_w[l]
                h = jnp.dot(node_feats, w1[...], preferred_element_type=jnp.float32)
                h = h * (1.0 / (1.0 + jnp.exp(-h)))           # silu gate
                node_energies = jnp.dot(h, w2[...], preferred_element_type=jnp.float32)
            else:
                (w1,) = read_w[l]
                node_energies = jnp.dot(node_feats, w1[...],
                                        preferred_element_type=jnp.float32)
            scalar_cols.append(node_energies)

        # TODO(synk): kappa production path is not shown in the reference forward;
        # surrogate = linear readout of the final node features.
        kappa = jnp.dot(node_feats, wkap_ref[...], preferred_element_type=jnp.float32)
        scalar_cols.append(kappa)

        n = attrs.shape[0]
        cidx = lax.broadcasted_iota(jnp.int32, (n, slab_cols), 1)
        slab = jnp.zeros((n, slab_cols), jnp.float32)
        for c, v in enumerate(scalar_cols):                   # pack lane-dense slab
            slab = slab + jnp.where(cidx == c, v, 0.0)

        nf_out[...] = node_feats
        nslab_out[...] = slab
        gslab_out[...] = jnp.dot(boh_ref[...], slab, preferred_element_type=jnp.float32)

    return kernel


def mace_core_forward(params, data, cfg):
    node_attrs = data["node_attrs"]
    edge_feats = data["edge_feats"]
    send_oh = data["send_onehot"]
    recv_oh = data["recv_onehot"]
    batch_oh = data["batch_onehot"]
    L = cfg["num_interactions"]
    slab_cols = cfg["slab_cols"]
    N = node_attrs.shape[0]
    F = params["w_embed"].shape[1]
    G = batch_oh.shape[0]

    inputs = [node_attrs, edge_feats, send_oh, recv_oh, batch_oh,
              params["atomic_energies"][:, None], params["w_embed"], params["w_kappa"]]
    for lp in params["layers"]:
        inputs += [lp["w_rad"], lp["w_mix"], lp["w_sc"], lp["w_prod"]]
    for l, lp in enumerate(params["layers"]):
        if l == L - 1:
            inputs += [lp["w_read1"], lp["w_read2"]]
        else:
            inputs += [lp["w_read"]]

    kernel = make_mace_core_kernel(L, 1.0 / float(cfg["avg_num_neighbors"]), slab_cols)
    node_feats, node_slab, graph_slab = pl.pallas_call(
        kernel,
        grid=(1,),
        in_specs=[_full_spec(x.shape) for x in inputs],
        out_specs=(_full_spec((N, F)), _full_spec((N, slab_cols)),
                   _full_spec((G, slab_cols))),
        out_shape=(jax.ShapeDtypeStruct((N, F), jnp.float32),
                   jax.ShapeDtypeStruct((N, slab_cols), jnp.float32),
                   jax.ShapeDtypeStruct((G, slab_cols), jnp.float32)),
        compiler_params=pltpu.CompilerParams(
            dimension_semantics=("arbitrary",),
            vmem_limit_bytes=VMEM_LIMIT_BYTES),
    )(*inputs)

    # columns: 0 = node_e0, 1..L = per-layer readout energies, L+1 = kappa
    # pair_repulsion=False in the reference -> pair contributions are zero.
    e_cols = 1 + L
    total_energy = jnp.sum(graph_slab[:, :e_cols], axis=-1, keepdims=True)   # [G,1]
    node_energy = jnp.sum(node_slab[:, :e_cols], axis=-1, keepdims=True)     # [N,1]
    kappa = node_slab[:, e_cols]                                             # [N]
    return total_energy, node_energy, node_feats, kappa


# -----------------------------------------------------------------------------
# long-range kernel A: tril(A_ij) for the bordered charge-equilibration solve
# (row tiled; factor / F_cut are never written to HBM)
# -----------------------------------------------------------------------------
def make_build_A_kernel(row_tile, n):
    def kernel(r_ref, erf_ref, eta_ref, sigma_ref, a_ref):
        row0 = pl.program_id(0) * row_tile
        R = r_ref[...]
        factor = erf_ref[...] / R                       # erf(R/(sqrt2*gamma)) / R
        row = lax.broadcasted_iota(jnp.int32, (row_tile, n), 0) + row0
        col = lax.broadcasted_iota(jnp.int32, (row_tile, n), 1)
        diag_vals = eta_ref[...] + 1.0 / (sigma_ref[...] * SQRT_PI)   # [tm,1]
        a_full = jnp.where(row == col, diag_vals, 0.0) + factor
        # reference applies torch.tril(A_ij) before building the bordered system
        a_ref[...] = jnp.where(row >= col, a_full, 0.0)
    return kernel


# -----------------------------------------------------------------------------
# long-range kernel B: fused electric energy + 2-body energy (row tiled)
# -----------------------------------------------------------------------------
def make_energy_kernel(row_tile, n, num_types, r_max, r_in, slab_cols):
    r_max = float(r_max)
    r_in = float(r_in)

    def kernel(r_ref, erf_ref, sigma_ref, q_ref, qT_ref, attrs_ref, attrsT_ref,
               refpk_ref, sb_ref, out_ref):
        row0 = pl.program_id(0) * row_tile
        R = r_ref[...]                                   # [tm, n]
        sb = sb_ref[...]                                 # same-graph mask [tm, n]
        qT = qT_ref[...]                                 # [1, n]
        q_rows = q_ref[...]                              # [tm, 1]

        # recompute factor and F_cut in-register (no N x N HBM round trip)
        factor = erf_ref[...] / R
        t2 = jnp.tanh(1.0 - (R - r_in) / (r_max - r_in)) ** 3
        fcut = jnp.where((R > 0.0) & (R < r_in), TANH1_CUBED,
                         jnp.where((R >= r_in) & (R <= r_max), t2, 0.0))

        # electric energy: width-1 mat-vecs done as broadcast-multiply + row reduce
        pot = jnp.sum(factor * fcut * qT, axis=-1, keepdims=True)          # (factor*Fcut)@q
        V = (jnp.sum(factor * qT, axis=-1, keepdims=True)
             + (0.5 / (sigma_ref[...] * SQRT_PI)) * q_rows)                # (diag+factor)@q
        aee = q_rows * V                                                   # q * V

        # 2-body energy: packed pair tables [A|B|C|D|mu] -> single small matmul
        T = num_types
        PA = jnp.dot(attrs_ref[...], refpk_ref[...],
                     preferred_element_type=jnp.float32)                   # [tm, 5T]
        Pt = attrsT_ref[...]                                               # [T, n]

        def pair(k):
            return jnp.dot(PA[:, k * T:(k + 1) * T], Pt,
                           preferred_element_type=jnp.float32) * sb

        A = pair(0); B = pair(1); C = pair(2); D = pair(3); mu = pair(4)
        invR2 = pl.reciprocal(R * R, approx=True)
        invR6 = invR2 * invR2 * invR2
        invR8 = invR6 * invR2
        E2 = (A * jnp.exp(B * (mu - R)) - C * invR6 - D * invR8) * fcut
        row = lax.broadcasted_iota(jnp.int32, (row_tile, n), 0) + row0
        col = lax.broadcasted_iota(jnp.int32, (row_tile, n), 1)
        E2 = jnp.where(row == col, 0.0, E2)                                # fill_diagonal_(0)
        a2b = 0.5 * jnp.sum(E2, axis=-1, keepdims=True)

        # pack per-node scalars into a lane-dense slab:
        # col 0 = atomic_potentials, 1 = V, 2 = atomic_E_electric, 3 = atomic_E_2b
        cidx = lax.broadcasted_iota(jnp.int32, (row_tile, slab_cols), 1)
        slab = (jnp.where(cidx == 0, pot, 0.0) + jnp.where(cidx == 1, V, 0.0)
                + jnp.where(cidx == 2, aee, 0.0) + jnp.where(cidx == 3, a2b, 0.0))
        out_ref[...] = slab

    return kernel


# -----------------------------------------------------------------------------
# JAX glue: radial / angular embeddings (sin, erf have no Mosaic lowering)
# -----------------------------------------------------------------------------
def radial_embedding(lengths, r_max, num_bessel, p):
    # TODO(synk): Bessel basis uses sin -> kept in JAX glue.
    r = lengths                                                # [E,1]
    n = jnp.arange(1, num_bessel + 1, dtype=jnp.float32)[None, :]
    bessel = jnp.sqrt(2.0 / r_max) * jnp.sin(n * jnp.pi * r / r_max) / r
    u = r / r_max
    env = (1.0
           - ((p + 1.0) * (p + 2.0) / 2.0) * u ** p
           + p * (p + 2.0) * u ** (p + 1)
           - (p * (p + 1.0) / 2.0) * u ** (p + 2))
    env = env * (r < r_max).astype(jnp.float32)
    return bessel * env                                        # [E, num_bessel]


def spherical_harmonics_l1(vectors, lengths):
    # TODO(synk): surrogate interaction does not consume edge_attrs (e3nn TP not given).
    unit = vectors / lengths
    return jnp.concatenate([jnp.ones_like(lengths), math.sqrt(3.0) * unit], axis=1)


# -----------------------------------------------------------------------------
# long-range forward (electric_equilibrium + total_energy_sum)
# -----------------------------------------------------------------------------
def long_range_forward(params, data, node_feats, kappa,
                       short_energy, atomic_short_energy, cfg):
    node_attrs = data["node_attrs"]
    batch = data["batch"]
    batch_onehot = data["batch_onehot"]
    nodes_per_graph = cfg["nodes_per_graph"]
    eps = cfg["eps"]
    row_tile = cfg["row_tile"]
    slab_cols = cfg["slab_cols"]
    N, T = node_attrs.shape
    G = batch_onehot.shape[0]
    assert N % row_tile == 0

    # make_params (one-hot selection of per-type reference parameters)
    ref_sigma = jnp.exp(params["ref_log_sigma"])
    sigma = node_attrs @ ref_sigma                              # [N]
    eta = node_attrs @ params["ref_eta"]                        # [N]
    same_batch = (batch[:, None] == batch[None, :]).astype(jnp.float32)
    gamma = jnp.where(same_batch > 0,
                      jnp.sqrt(sigma[:, None] ** 2 + sigma[None, :] ** 2), eps)

    # TODO(synk): create_distance_matrix is not provided; reproduced as a dense
    # scatter of edge lengths with eps fill (diagonal / non-edge = eps).
    R = jnp.full((N, N), eps, dtype=jnp.float32)
    R = R.at[data["senders"], data["receivers"]].set(data["lengths"][:, 0])

    # TODO(synk): erf has no Mosaic lowering -> computed in glue, fed to kernels.
    erfv = erf(R / (math.sqrt(2.0) * gamma))

    cparams = pltpu.CompilerParams(dimension_semantics=("parallel",),
                                   vmem_limit_bytes=VMEM_LIMIT_BYTES)

    # kernel A: tril A matrix for the bordered solve
    A_tril = pl.pallas_call(
        make_build_A_kernel(row_tile, N),
        grid=(N // row_tile,),
        in_specs=[_row_spec(row_tile, N), _row_spec(row_tile, N),
                  _row_spec(row_tile, 1), _row_spec(row_tile, 1)],
        out_specs=_row_spec(row_tile, N),
        out_shape=jax.ShapeDtypeStruct((N, N), jnp.float32),
        compiler_params=cparams,
    )(R, erfv, eta[:, None], sigma[:, None])

    # bordered (Lagrange multiplier) system per graph — static shapes, glue
    Next = N + G
    A_ext = jnp.zeros((Next, Next), dtype=jnp.float32)
    kappa_ext = jnp.zeros((Next,), dtype=jnp.float32)
    keep = []
    idx = 0
    idx_ext = 0
    for n_g in nodes_per_graph:
        block = A_tril[idx:idx + n_g, idx:idx + n_g]
        block = jnp.concatenate([block, jnp.ones((1, n_g), jnp.float32)], axis=0)
        block = jnp.concatenate([block, jnp.ones((n_g + 1, 1), jnp.float32)], axis=1)
        block = block.at[-1, -1].set(0.0)
        A_ext = A_ext.at[idx_ext:idx_ext + n_g + 1, idx_ext:idx_ext + n_g + 1].set(block)
        kappa_ext = kappa_ext.at[idx_ext:idx_ext + n_g].set(kappa[idx:idx + n_g])
        kappa_ext = kappa_ext.at[idx_ext + n_g].set(cfg["Q_tot"])
        keep.extend(range(idx_ext, idx_ext + n_g))
        idx += n_g
        idx_ext += n_g + 1

    # TODO(synk): torch.linalg.solve has no Pallas equivalent -> jnp.linalg.solve.
    charges_ext = jnp.linalg.solve(A_ext, -kappa_ext)
    q = charges_ext[jnp.array(keep, dtype=jnp.int32)][:, None]          # [N,1]

    # kernel B: fused electric + 2-body energies (recomputes factor / F_cut)
    ref_packed = jnp.concatenate([params["ref_A"], params["ref_B"], params["ref_C"],
                                  params["ref_D"], params["ref_mu"]], axis=1)   # [T, 5T]
    energy_slab = pl.pallas_call(
        make_energy_kernel(row_tile, N, T, cfg["r_max"], cfg["r_in"], slab_cols),
        grid=(N // row_tile,),
        in_specs=[_row_spec(row_tile, N),                       # R
                  _row_spec(row_tile, N),                       # erfv
                  _row_spec(row_tile, 1),                       # sigma
                  _row_spec(row_tile, 1),                       # q (tile rows)
                  pl.BlockSpec((1, N), lambda i: (0, 0)),       # q^T (full)
                  pl.BlockSpec((row_tile, T), lambda i: (i, 0)),# node_attrs rows
                  pl.BlockSpec((T, N), lambda i: (0, 0)),       # node_attrs^T (full)
                  pl.BlockSpec((T, 5 * T), lambda i: (0, 0)),   # packed pair tables
                  _row_spec(row_tile, N)],                      # same_batch mask
        out_specs=_row_spec(row_tile, slab_cols),
        out_shape=jax.ShapeDtypeStruct((N, slab_cols), jnp.float32),
        compiler_params=cparams,
    )(R, erfv, sigma[:, None], q, q.reshape(1, N), node_attrs,
      jnp.transpose(node_attrs), ref_packed, same_batch)

    atomic_potentials = energy_slab[:, 0:1]
    atomic_E_electric = energy_slab[:, 2:3]
    atomic_E_2b = energy_slab[:, 3:4]
    graph_red = batch_onehot @ energy_slab                      # tiny scatter-sum, glue
    E_electric = graph_red[:, 2:3]
    E_2b = graph_red[:, 3:4]

    node_feats_out = jnp.concatenate([node_feats, q, atomic_potentials], axis=1)
    E_tot = E_electric + E_2b + short_energy                    # [G,1]
    atomic_E = atomic_E_electric + atomic_E_2b + atomic_short_energy

    return {
        "atomic_charges": q,
        "atomic_potentials": atomic_potentials,
        "atomic_electric_energy": atomic_E_electric,
        "electric_energy": E_electric,
        "atomic_E_2b": atomic_E_2b,
        "E_2b": E_2b,
        "node_feats": node_feats_out,
        "energy": E_tot,
        "node_energy": atomic_E,
    }


# -----------------------------------------------------------------------------
# main
# -----------------------------------------------------------------------------
if __name__ == "__main__":
    key = jax.random.PRNGKey(0)

    # small config (feature dims padded to 128 for lane-dense MXU / stores)
    T = 4                  # num_elements
    F = 128                # hidden scalar features (padded to lane width)
    mlp_hidden = 128
    num_bessel = 8
    num_poly = 5
    num_interactions = 2
    r_max, r_in = 6.0, 1.0
    eps = 1e-3             # reference default 1e-12 (f64); raised for f32 TPU
    Q_tot = 0.0
    nodes_per_graph = [8, 8]
    N = sum(nodes_per_graph)
    G = len(nodes_per_graph)
    avg_num_neighbors = float(nodes_per_graph[0] - 1)
    SLAB = 128             # lane-dense per-node scalar slab width
    ROW_TILE = 8           # row-block size for the N x N kernels

    # graph data ---------------------------------------------------------------
    k_pos, k_type, *wkeys = jax.random.split(key, 16)
    positions = jax.random.uniform(k_pos, (N, 3), dtype=jnp.float32) * 3.0
    types = jax.random.randint(k_type, (N,), 0, T)
    node_attrs = jax.nn.one_hot(types, T, dtype=jnp.float32)            # [N, T]
    batch = jnp.array(sum([[g] * n for g, n in enumerate(nodes_per_graph)], []),
                      dtype=jnp.int32)
    batch_onehot = jax.nn.one_hot(batch, G, dtype=jnp.float32).T        # [G, N]

    senders, receivers = [], []
    off = 0
    for n_g in nodes_per_graph:
        for i in range(n_g):
            for j in range(n_g):
                if i != j:
                    senders.append(off + i)
                    receivers.append(off + j)
        off += n_g
    senders = jnp.array(senders, dtype=jnp.int32)
    receivers = jnp.array(receivers, dtype=jnp.int32)
    E = senders.shape[0]
    vectors = positions[receivers] - positions[senders]
    lengths = jnp.linalg.norm(vectors, axis=-1, keepdims=True)          # [E,1]
    # TODO(synk): keep one-hot gather/scatter inside the fused kernel; replacing
    # them with scalar-prefetch index gathers is the next step at production E, N.
    send_onehot = jax.nn.one_hot(senders, N, dtype=jnp.float32)         # [E, N]
    recv_onehot = jax.nn.one_hot(receivers, N, dtype=jnp.float32).T     # [N, E]

    edge_attrs = spherical_harmonics_l1(vectors, lengths)
    del edge_attrs
    edge_feats = radial_embedding(lengths, r_max, num_bessel, num_poly)  # [E, B]

    data = dict(node_attrs=node_attrs, batch=batch, batch_onehot=batch_onehot,
                senders=senders, receivers=receivers, lengths=lengths,
                send_onehot=send_onehot, recv_onehot=recv_onehot,
                edge_feats=edge_feats)

    # deterministic parameters ---------------------------------------------------
    def w(k, shape, scale=0.1):
        return jax.random.normal(k, shape, dtype=jnp.float32) * scale

    layers = []
    for li in range(num_interactions):
        kk = jax.random.split(wkeys[li], 6)
        layers.append(dict(
            w_rad=w(kk[0], (num_bessel, F)),
            w_mix=w(kk[1], (F, F)),
            w_sc=w(kk[2], (F, F)),
            w_prod=w(kk[3], (F, F)),
            w_read=w(kk[4], (F, 1)),
            w_read1=w(kk[4], (F, mlp_hidden)),
            w_read2=w(kk[5], (mlp_hidden, 1)),
        ))

    i_t = np.arange(T, dtype=np.float32)
    pair_pert = 1.0 + 0.02 * (i_t[:, None] + i_t[None, :])
    params = dict(
        atomic_energies=jnp.array([-1.0, -2.0, -3.0, -4.0], dtype=jnp.float32),
        w_embed=w(wkeys[4], (T, F)),
        w_kappa=w(wkeys[5], (F, 1)),
        layers=layers,
        # ee4G-HDNNP reference parameters (initial_ref_params defaults,
        # deterministically perturbed per element type)
        ref_eta=jnp.asarray(0.0107 * (1.0 + 0.1 * i_t), dtype=jnp.float32),
        ref_log_sigma=jnp.log(jnp.asarray(0.25 * (1.0 + 0.05 * i_t), dtype=jnp.float32)),
        ref_A=jnp.asarray(46.613 * pair_pert, dtype=jnp.float32),
        ref_B=jnp.asarray(3.98 * pair_pert, dtype=jnp.float32),
        ref_C=jnp.asarray(274.432 * pair_pert, dtype=jnp.float32),
        ref_D=jnp.asarray(0.5 * pair_pert, dtype=jnp.float32),
        ref_mu=jnp.asarray(1.918 * pair_pert, dtype=jnp.float32),
    )

    cfg = dict(r_max=r_max, r_in=r_in, eps=eps, Q_tot=Q_tot,
               num_bessel=num_bessel, num_polynomial_cutoff=num_poly,
               num_interactions=num_interactions,
               avg_num_neighbors=avg_num_neighbors,
               nodes_per_graph=nodes_per_graph,
               slab_cols=SLAB, row_tile=ROW_TILE)

    # MACE core forward (one fused pallas_call)
    total_energy, node_energy, node_feats, kappa = mace_core_forward(params, data, cfg)

    # long-range ee4G branch (electric_equilibrium + total_energy_sum), using the
    # MACE output as the "short" energy contribution.
    out = long_range_forward(params, data, node_feats, kappa,
                             total_energy, node_energy, cfg)

    jax.block_until_ready((total_energy, node_energy, out["atomic_charges"],
                           out["electric_energy"], out["energy"], out["node_energy"]))

    ok = (bool(jnp.all(jnp.isfinite(total_energy)))
          and bool(jnp.all(jnp.isfinite(out["energy"])))
          and bool(jnp.all(jnp.isfinite(out["node_energy"])))
          and bool(jnp.all(jnp.isfinite(out["atomic_charges"]))))
    if ok:
        print("KERNEL_OK")
</pallas_src>

<mosaic_0001>
module attributes {stable_mosaic.version = 11 : i64} {
  func.func @kernel(%arg0: i32, %arg1: memref<16x4xf32, #tpu.memory_space<vmem>>, %arg2: memref<112x8xf32, #tpu.memory_space<vmem>>, %arg3: memref<112x16xf32, #tpu.memory_space<vmem>>, %arg4: memref<16x112xf32, #tpu.memory_space<vmem>>, %arg5: memref<2x16xf32, #tpu.memory_space<vmem>>, %arg6: memref<4x1xf32, #tpu.memory_space<vmem>>, %arg7: memref<4x128xf32, #tpu.memory_space<vmem>>, %arg8: memref<128x1xf32, #tpu.memory_space<vmem>>, %arg9: memref<8x128xf32, #tpu.memory_space<vmem>>, %arg10: memref<128x128xf32, #tpu.memory_space<vmem>>, %arg11: memref<128x128xf32, #tpu.memory_space<vmem>>, %arg12: memref<128x128xf32, #tpu.memory_space<vmem>>, %arg13: memref<8x128xf32, #tpu.memory_space<vmem>>, %arg14: memref<128x128xf32, #tpu.memory_space<vmem>>, %arg15: memref<128x128xf32, #tpu.memory_space<vmem>>, %arg16: memref<128x128xf32, #tpu.memory_space<vmem>>, %arg17: memref<128x1xf32, #tpu.memory_space<vmem>>, %arg18: memref<128x128xf32, #tpu.memory_space<vmem>>, %arg19: memref<128x1xf32, #tpu.memory_space<vmem>>, %arg20: memref<16x128xf32, #tpu.memory_space<vmem>>, %arg21: memref<16x128xf32, #tpu.memory_space<vmem>>, %arg22: memref<2x128xf32, #tpu.memory_space<vmem>>) attributes {dimension_semantics = [#tpu.dimension_semantics<arbitrary>], iteration_bounds = array<i64: 1>, scalar_prefetch = 0 : i64, scratch_operands = 0 : i64, tpu.core_type = #tpu.core_type<tc>, window_params = [{pipeline_mode = #tpu.pipeline_mode<synchronous>, transform_indices = @transform_0, window_bounds = array<i64: 16, 4>}, {pipeline_mode = #tpu.pipeline_mode<synchronous>, transform_indices = @transform_1, window_bounds = array<i64: 112, 8>}, {pipeline_mode = #tpu.pipeline_mode<synchronous>, transform_indices = @transform_2, window_bounds = array<i64: 112, 16>}, {pipeline_mode = #tpu.pipeline_mode<synchronous>, transform_indices = @transform_3, window_bounds = array<i64: 16, 112>}, {pipeline_mode = #tpu.pipeline_mode<synchronous>, transform_indices = @transform_4, window_bounds = array<i64: 2, 16>}, {pipeline_mode = #tpu.pipeline_mode<synchronous>, transform_indices = @transform_5, window_bounds = array<i64: 4, 1>}, {pipeline_mode = #tpu.pipeline_mode<synchronous>, transform_indices = @transform_6, window_bounds = array<i64: 4, 128>}, {pipeline_mode = #tpu.pipeline_mode<synchronous>, transform_indices = @transform_7, window_bounds = array<i64: 128, 1>}, {pipeline_mode = #tpu.pipeline_mode<synchronous>, transform_indices = @transform_8, window_bounds = array<i64: 8, 128>}, {pipeline_mode = #tpu.pipeline_mode<synchronous>, transform_indices = @transform_9, window_bounds = array<i64: 128, 128>}, {pipeline_mode = #tpu.pipeline_mode<synchronous>, transform_indices = @transform_10, window_bounds = array<i64: 128, 128>}, {pipeline_mode = #tpu.pipeline_mode<synchronous>, transform_indices = @transform_11, window_bounds = array<i64: 128, 128>}, {pipeline_mode = #tpu.pipeline_mode<synchronous>, transform_indices = @transform_12, window_bounds = array<i64: 8, 128>}, {pipeline_mode = #tpu.pipeline_mode<synchronous>, transform_indices = @transform_13, window_bounds = array<i64: 128, 128>}, {pipeline_mode = #tpu.pipeline_mode<synchronous>, transform_indices = @transform_14, window_bounds = array<i64: 128, 128>}, {pipeline_mode = #tpu.pipeline_mode<synchronous>, transform_indices = @transform_15, window_bounds = array<i64: 128, 128>}, {pipeline_mode = #tpu.pipeline_mode<synchronous>, transform_indices = @transform_16, window_bounds = array<i64: 128, 1>}, {pipeline_mode = #tpu.pipeline_mode<synchronous>, transform_indices = @transform_17, window_bounds = array<i64: 128, 128>}, {pipeline_mode = #tpu.pipeline_mode<synchronous>, transform_indices = @transform_18, window_bounds = array<i64: 128, 1>}, {pipeline_mode = #tpu.pipeline_mode<synchronous>, transform_indices = @transform_19, window_bounds = array<i64: 16, 128>}, {pipeline_mode = #tpu.pipeline_mode<synchronous>, transform_indices = @transform_20, window_bounds = array<i64: 16, 128>}, {pipeline_mode = #tpu.pipeline_mode<synchronous>, transform_indices = @transform_21, window_bounds = array<i64: 2, 128>}]} {
    %c0 = arith.constant 0 : index
    %c0_0 = arith.constant 0 : index
    %0 = vector.load %arg1[%c0, %c0_0] : memref<16x4xf32, #tpu.memory_space<vmem>>, vector<16x4xf32>
    %c0_1 = arith.constant 0 : index
    %c0_2 = arith.constant 0 : index
    %1 = vector.load %arg3[%c0_1, %c0_2] : memref<112x16xf32, #tpu.memory_space<vmem>>, vector<112x16xf32>
    %c0_3 = arith.constant 0 : index
    %c0_4 = arith.constant 0 : index
    %2 = vector.load %arg4[%c0_3, %c0_4] : memref<16x112xf32, #tpu.memory_space<vmem>>, vector<16x112xf32>
    %c0_5 = arith.constant 0 : index
    %c0_6 = arith.constant 0 : index
    %3 = vector.load %arg2[%c0_5, %c0_6] : memref<112x8xf32, #tpu.memory_space<vmem>>, vector<112x8xf32>
    %c0_7 = arith.constant 0 : index
    %c0_8 = arith.constant 0 : index
    %4 = vector.load %arg6[%c0_7, %c0_8] : memref<4x1xf32, #tpu.memory_space<vmem>>, vector<4x1xf32>
    %cst = arith.constant dense<0.000000e+00> : vector<16x1xf32>
    %5 = tpu.matmul %0, %4, %cst {dimension_numbers = #tpu.dot_dimension_numbers<[1], [0], [0], [1], [0, 0, 1, 1], [], []>} : vector<16x4xf32>, vector<4x1xf32>, vector<16x1xf32> -> vector<16x1xf32>
    %c0_9 = arith.constant 0 : index
    %c0_10 = arith.constant 0 : index
    %6 = vector.load %arg7[%c0_9, %c0_10] : memref<4x128xf32, #tpu.memory_space<vmem>>, vector<4x128xf32>
    %cst_11 = arith.constant dense<0.000000e+00> : vector<16x128xf32>
    %7 = tpu.matmul %0, %6, %cst_11 {dimension_numbers = #tpu.dot_dimension_numbers<[1], [0], [0], [1], [0, 0, 1, 1], [], []>} : vector<16x4xf32>, vector<4x128xf32>, vector<16x128xf32> -> vector<16x128xf32>
    %cst_12 = arith.constant dense<0.000000e+00> : vector<112x128xf32>
    %8 = tpu.matmul %1, %7, %cst_12 {dimension_numbers = #tpu.dot_dimension_numbers<[1], [0], [0], [1], [0, 0, 1, 1], [], []>} : vector<112x16xf32>, vector<16x128xf32>, vector<112x128xf32> -> vector<112x128xf32>
    %c0_13 = arith.constant 0 : index
    %c0_14 = arith.constant 0 : index
    %9 = vector.load %arg9[%c0_13, %c0_14] : memref<8x128xf32, #tpu.memory_space<vmem>>, vector<8x128xf32>
    %cst_15 = arith.constant dense<0.000000e+00> : vector<112x128xf32>
    %10 = tpu.matmul %3, %9, %cst_15 {dimension_numbers = #tpu.dot_dimension_numbers<[1], [0], [0], [1], [0, 0, 1, 1], [], []>} : vector<112x8xf32>, vector<8x128xf32>, vector<112x128xf32> -> vector<112x128xf32>
    %11 = arith.mulf %8, %10 : vector<112x128xf32>
    %cst_16 = arith.constant dense<0.000000e+00> : vector<16x128xf32>
    %12 = tpu.matmul %2, %11, %cst_16 {dimension_numbers = #tpu.dot_dimension_numbers<[1], [0], [0], [1], [0, 0, 1, 1], [], []>} : vector<16x112xf32>, vector<112x128xf32>, vector<16x128xf32> -> vector<16x128xf32>
    %cst_17 = arith.constant 0.142857149 : f32
    %13 = vector.broadcast %cst_17 : f32 to vector<16x128xf32>
    %14 = arith.mulf %12, %13 : vector<16x128xf32>
    %c0_18 = arith.constant 0 : index
    %c0_19 = arith.constant 0 : index
    %15 = vector.load %arg10[%c0_18, %c0_19] : memref<128x128xf32, #tpu.memory_space<vmem>>, vector<128x128xf32>
    %cst_20 = arith.constant dense<0.000000e+00> : vector<16x128xf32>
    %16 = tpu.matmul %14, %15, %cst_20 {dimension_numbers = #tpu.dot_dimension_numbers<[1], [0], [0], [1], [0, 0, 1, 1], [], []>} : vector<16x128xf32>, vector<128x128xf32>, vector<16x128xf32> -> vector<16x128xf32>
    %c0_21 = arith.constant 0 : index
    %c0_22 = arith.constant 0 : index
    %17 = vector.load %arg11[%c0_21, %c0_22] : memref<128x128xf32, #tpu.memory_space<vmem>>, vector<128x128xf32>
    %cst_23 = arith.constant dense<0.000000e+00> : vector<16x128xf32>
    %18 = tpu.matmul %7, %17, %cst_23 {dimension_numbers = #tpu.dot_dimension_numbers<[1], [0], [0], [1], [0, 0, 1, 1], [], []>} : vector<16x128xf32>, vector<128x128xf32>, vector<16x128xf32> -> vector<16x128xf32>
    %c0_24 = arith.constant 0 : index
    %c0_25 = arith.constant 0 : index
    %19 = vector.load %arg12[%c0_24, %c0_25] : memref<128x128xf32, #tpu.memory_space<vmem>>, vector<128x128xf32>
    %cst_26 = arith.constant dense<0.000000e+00> : vector<16x128xf32>
    %20 = tpu.matmul %16, %19, %cst_26 {dimension_numbers = #tpu.dot_dimension_numbers<[1], [0], [0], [1], [0, 0, 1, 1], [], []>} : vector<16x128xf32>, vector<128x128xf32>, vector<16x128xf32> -> vector<16x128xf32>
    %21 = arith.addf %20, %18 : vector<16x128xf32>
    %c0_27 = arith.constant 0 : index
    %c0_28 = arith.constant 0 : index
    %22 = vector.load %arg17[%c0_27, %c0_28] : memref<128x1xf32, #tpu.memory_space<vmem>>, vector<128x1xf32>
    %cst_29 = arith.constant dense<0.000000e+00> : vector<16x1xf32>
    %23 = tpu.matmul %21, %22, %cst_29 {dimension_numbers = #tpu.dot_dimension_numbers<[1], [0], [0], [1], [0, 0, 1, 1], [], []>} : vector<16x128xf32>, vector<128x1xf32>, vector<16x1xf32> -> vector<16x1xf32>
    %cst_30 = arith.constant dense<0.000000e+00> : vector<112x128xf32>
    %24 = tpu.matmul %1, %21, %cst_30 {dimension_numbers = #tpu.dot_dimension_numbers<[1], [0], [0], [1], [0, 0, 1, 1], [], []>} : vector<112x16xf32>, vector<16x128xf32>, vector<112x128xf32> -> vector<112x128xf32>
    %c0_31 = arith.constant 0 : index
    %c0_32 = arith.constant 0 : index
    %25 = vector.load %arg13[%c0_31, %c0_32] : memref<8x128xf32, #tpu.memory_space<vmem>>, vector<8x128xf32>
    %cst_33 = arith.constant dense<0.000000e+00> : vector<112x128xf32>
    %26 = tpu.matmul %3, %25, %cst_33 {dimension_numbers = #tpu.dot_dimension_numbers<[1], [0], [0], [1], [0, 0, 1, 1], [], []>} : vector<112x8xf32>, vector<8x128xf32>, vector<112x128xf32> -> vector<112x128xf32>
    %27 = arith.mulf %24, %26 : vector<112x128xf32>
    %cst_34 = arith.constant dense<0.000000e+00> : vector<16x128xf32>
    %28 = tpu.matmul %2, %27, %cst_34 {dimension_numbers = #tpu.dot_dimension_numbers<[1], [0], [0], [1], [0, 0, 1, 1], [], []>} : vector<16x112xf32>, vector<112x128xf32>, vector<16x128xf32> -> vector<16x128xf32>
    %cst_35 = arith.constant 0.142857149 : f32
    %29 = vector.broadcast %cst_35 : f32 to vector<16x128xf32>
    %30 = arith.mulf %28, %29 : vector<16x128xf32>
    %c0_36 = arith.constant 0 : index
    %c0_37 = arith.constant 0 : index
    %31 = vector.load %arg14[%c0_36, %c0_37] : memref<128x128xf32, #tpu.memory_space<vmem>>, vector<128x128xf32>
    %cst_38 = arith.constant dense<0.000000e+00> : vector<16x128xf32>
    %32 = tpu.matmul %30, %31, %cst_38 {dimension_numbers = #tpu.dot_dimension_numbers<[1], [0], [0], [1], [0, 0, 1, 1], [], []>} : vector<16x128xf32>, vector<128x128xf32>, vector<16x128xf32> -> vector<16x128xf32>
    %c0_39 = arith.constant 0 : index
    %c0_40 = arith.constant 0 : index
    %33 = vector.load %arg15[%c0_39, %c0_40] : memref<128x128xf32, #tpu.memory_space<vmem>>, vector<128x128xf32>
    %cst_41 = arith.constant dense<0.000000e+00> : vector<16x128xf32>
    %34 = tpu.matmul %21, %33, %cst_41 {dimension_numbers = #tpu.dot_dimension_numbers<[1], [0], [0], [1], [0, 0, 1, 1], [], []>} : vector<16x128xf32>, vector<128x128xf32>, vector<16x128xf32> -> vector<16x128xf32>
    %c0_42 = arith.constant 0 : index
    %c0_43 = arith.constant 0 : index
    %35 = vector.load %arg16[%c0_42, %c0_43] : memref<128x128xf32, #tpu.memory_space<vmem>>, vector<128x128xf32>
    %cst_44 = arith.constant dense<0.000000e+00> : vector<16x128xf32>
    %36 = tpu.matmul %32, %35, %cst_44 {dimension_numbers = #tpu.dot_dimension_numbers<[1], [0], [0], [1], [0, 0, 1, 1], [], []>} : vector<16x128xf32>, vector<128x128xf32>, vector<16x128xf32> -> vector<16x128xf32>
    %37 = arith.addf %36, %34 : vector<16x128xf32>
    %c0_45 = arith.constant 0 : index
    %c0_46 = arith.constant 0 : index
    %38 = vector.load %arg18[%c0_45, %c0_46] : memref<128x128xf32, #tpu.memory_space<vmem>>, vector<128x128xf32>
    %cst_47 = arith.constant dense<0.000000e+00> : vector<16x128xf32>
    %39 = tpu.matmul %37, %38, %cst_47 {dimension_numbers = #tpu.dot_dimension_numbers<[1], [0], [0], [1], [0, 0, 1, 1], [], []>} : vector<16x128xf32>, vector<128x128xf32>, vector<16x128xf32> -> vector<16x128xf32>
    %cst_48 = arith.constant 0.000000e+00 : f32
    %40 = vector.broadcast %cst_48 : f32 to vector<16x128xf32>
    %41 = arith.subf %40, %39 : vector<16x128xf32>
    %42 = math.exp %41 : vector<16x128xf32>
    %cst_49 = arith.constant 1.000000e+00 : f32
    %43 = vector.broadcast %cst_49 : f32 to vector<16x128xf32>
    %44 = arith.addf %43, %42 : vector<16x128xf32>
    %cst_50 = arith.constant 1.000000e+00 : f32
    %45 = vector.broadcast %cst_50 : f32 to vector<16x128xf32>
    %46 = arith.divf %45, %44 : vector<16x128xf32>
    %47 = arith.mulf %39, %46 : vector<16x128xf32>
    %c0_51 = arith.constant 0 : index
    %c0_52 = arith.constant 0 : index
    %48 = vector.load %arg19[%c0_51, %c0_52] : memref<128x1xf32, #tpu.memory_space<vmem>>, vector<128x1xf32>
    %cst_53 = arith.constant dense<0.000000e+00> : vector<16x1xf32>
    %49 = tpu.matmul %47, %48, %cst_53 {dimension_numbers = #tpu.dot_dimension_numbers<[1], [0], [0], [1], [0, 0, 1, 1], [], []>} : vector<16x128xf32>, vector<128x1xf32>, vector<16x1xf32> -> vector<16x1xf32>
    %c0_54 = arith.constant 0 : index
    %c0_55 = arith.constant 0 : index
    %50 = vector.load %arg8[%c0_54, %c0_55] : memref<128x1xf32, #tpu.memory_space<vmem>>, vector<128x1xf32>
    %cst_56 = arith.constant dense<0.000000e+00> : vector<16x1xf32>
    %51 = tpu.matmul %37, %50, %cst_56 {dimension_numbers = #tpu.dot_dimension_numbers<[1], [0], [0], [1], [0, 0, 1, 1], [], []>} : vector<16x128xf32>, vector<128x1xf32>, vector<16x1xf32> -> vector<16x1xf32>
    %52 = tpu.iota {dimensions = array<i32: 1>} : vector<16x128xi32>
    %cst_57 = arith.constant 0.000000e+00 : f32
    %53 = vector.broadcast %cst_57 : f32 to vector<16x128xf32>
    %c0_i32 = arith.constant 0 : i32
    %54 = vector.broadcast %c0_i32 : i32 to vector<16x128xi32>
    %55 = arith.cmpi eq, %52, %54 : vector<16x128xi32>
    %cst_58 = arith.constant 0.000000e+00 : f32
    %56 = vector.shape_cast %5 : vector<16x1xf32> to vector<16x1xf32>
    %57 = vector.broadcast %56 : vector<16x1xf32> to vector<16x128xf32>
    %58 = vector.broadcast %cst_58 : f32 to vector<16x128xf32>
    %59 = arith.select %55, %57, %58 : vector<16x128xi1>, vector<16x128xf32>
    %60 = arith.addf %53, %59 : vector<16x128xf32>
    %c1_i32 = arith.constant 1 : i32
    %61 = vector.broadcast %c1_i32 : i32 to vector<16x128xi32>
    %62 = arith.cmpi eq, %52, %61 : vector<16x128xi32>
    %cst_59 = arith.constant 0.000000e+00 : f32
    %63 = vector.shape_cast %23 : vector<16x1xf32> to vector<16x1xf32>
    %64 = vector.broadcast %63 : vector<16x1xf32> to vector<16x128xf32>
    %65 = vector.broadcast %cst_59 : f32 to vector<16x128xf32>
    %66 = arith.select %62, %64, %65 : vector<16x128xi1>, vector<16x128xf32>
    %67 = arith.addf %60, %66 : vector<16x128xf32>
    %c2_i32 = arith.constant 2 : i32
    %68 = vector.broadcast %c2_i32 : i32 to vector<16x128xi32>
    %69 = arith.cmpi eq, %52, %68 : vector<16x128xi32>
    %cst_60 = arith.constant 0.000000e+00 : f32
    %70 = vector.shape_cast %49 : vector<16x1xf32> to vector<16x1xf32>
    %71 = vector.broadcast %70 : vector<16x1xf32> to vector<16x128xf32>
    %72 = vector.broadcast %cst_60 : f32 to vector<16x128xf32>
    %73 = arith.select %69, %71, %72 : vector<16x128xi1>, vector<16x128xf32>
    %74 = arith.addf %67, %73 : vector<16x128xf32>
    %c3_i32 = arith.constant 3 : i32
    %75 = vector.broadcast %c3_i32 : i32 to vector<16x128xi32>
    %76 = arith.cmpi eq, %52, %75 : vector<16x128xi32>
    %cst_61 = arith.constant 0.000000e+00 : f32
    %77 = vector.shape_cast %51 : vector<16x1xf32> to vector<16x1xf32>
    %78 = vector.broadcast %77 : vector<16x1xf32> to vector<16x128xf32>
    %79 = vector.broadcast %cst_61 : f32 to vector<16x128xf32>
    %80 = arith.select %76, %78, %79 : vector<16x128xi1>, vector<16x128xf32>
    %81 = arith.addf %74, %80 : vector<16x128xf32>
    %c0_62 = arith.constant 0 : index
    %c0_63 = arith.constant 0 : index
    %82 = vector.load %arg20[%c0_62, %c0_63] : memref<16x128xf32, #tpu.memory_space<vmem>>, vector<16x128xf32>
    tpu.vector_store %arg20[%c0_62, %c0_63], %37 {strides = array<i32>} : memref<16x128xf32, #tpu.memory_space<vmem>>, vector<16x128xf32>,
    %c0_64 = arith.constant 0 : index
    %c0_65 = arith.constant 0 : index
    %83 = vector.load %arg21[%c0_64, %c0_65] : memref<16x128xf32, #tpu.memory_space<vmem>>, vector<16x128xf32>
    tpu.vector_store %arg21[%c0_64, %c0_65], %81 {strides = array<i32>} : memref<16x128xf32, #tpu.memory_space<vmem>>, vector<16x128xf32>,
    %c0_66 = arith.constant 0 : index
    %c0_67 = arith.constant 0 : index
    %84 = vector.load %arg5[%c0_66, %c0_67] : memref<2x16xf32, #tpu.memory_space<vmem>>, vector<2x16xf32>
    %cst_68 = arith.constant dense<0.000000e+00> : vector<2x128xf32>
    %85 = tpu.matmul %84, %81, %cst_68 {dimension_numbers = #tpu.dot_dimension_numbers<[1], [0], [0], [1], [0, 0, 1, 1], [], []>} : vector<2x16xf32>, vector<16x128xf32>, vector<2x128xf32> -> vector<2x128xf32>
    %c0_69 = arith.constant 0 : index
    %c0_70 = arith.constant 0 : index
    %86 = vector.load %arg22[%c0_69, %c0_70] : memref<2x128xf32, #tpu.memory_space<vmem>>, vector<2x128xf32>
    tpu.vector_store %arg22[%c0_69, %c0_70], %85 {strides = array<i32>} : memref<2x128xf32, #tpu.memory_space<vmem>>, vector<2x128xf32>,
    return
  }
  func.func @transform_0(%arg0: i32) -> (i32, i32) {
    %c0_i32 = arith.constant 0 : i32
    %c0_i32_0 = arith.constant 0 : i32
    %c0_i32_1 = arith.constant 0 : i32
    return %c0_i32, %c0_i32_0 : i32, i32
  }
  func.func @transform_1(%arg0: i32) -> (i32, i32) {
    %c0_i32 = arith.constant 0 : i32
    %c0_i32_0 = arith.constant 0 : i32
    %c0_i32_1 = arith.constant 0 : i32
    return %c0_i32, %c0_i32_0 : i32, i32
  }
  func.func @transform_2(%arg0: i32) -> (i32, i32) {
    %c0_i32 = arith.constant 0 : i32
    %c0_i32_0 = arith.constant 0 : i32
    %c0_i32_1 = arith.constant 0 : i32
    return %c0_i32, %c0_i32_0 : i32, i32
  }
  func.func @transform_3(%arg0: i32) -> (i32, i32) {
    %c0_i32 = arith.constant 0 : i32
    %c0_i32_0 = arith.constant 0 : i32
    %c0_i32_1 = arith.constant 0 : i32
    return %c0_i32, %c0_i32_0 : i32, i32
  }
  func.func @transform_4(%arg0: i32) -> (i32, i32) {
    %c0_i32 = arith.constant 0 : i32
    %c0_i32_0 = arith.constant 0 : i32
    %c0_i32_1 = arith.constant 0 : i32
    return %c0_i32, %c0_i32_0 : i32, i32
  }
  func.func @transform_5(%arg0: i32) -> (i32, i32) {
    %c0_i32 = arith.constant 0 : i32
    %c0_i32_0 = arith.constant 0 : i32
    %c0_i32_1 = arith.constant 0 : i32
    return %c0_i32, %c0_i32_0 : i32, i32
  }
  func.func @transform_6(%arg0: i32) -> (i32, i32) {
    %c0_i32 = arith.constant 0 : i32
    %c0_i32_0 = arith.constant 0 : i32
    %c0_i32_1 = arith.constant 0 : i32
    return %c0_i32, %c0_i32_0 : i32, i32
  }
  func.func @transform_7(%arg0: i32) -> (i32, i32) {
    %c0_i32 = arith.constant 0 : i32
    %c0_i32_0 = arith.constant 0 : i32
    %c0_i32_1 = arith.constant 0 : i32
    return %c0_i32, %c0_i32_0 : i32, i32
  }
  func.func @transform_8(%arg0: i32) -> (i32, i32) {
    %c0_i32 = arith.constant 0 : i32
    %c0_i32_0 = arith.constant 0 : i32
    %c0_i32_1 = arith.constant 0 : i32
    return %c0_i32, %c0_i32_0 : i32, i32
  }
  func.func @transform_9(%arg0: i32) -> (i32, i32) {
    %c0_i32 = arith.constant 0 : i32
    %c0_i32_0 = arith.constant 0 : i32
    %c0_i32_1 = arith.constant 0 : i32
    return %c0_i32, %c0_i32_0 : i32, i32
  }
  func.func @transform_10(%arg0: i32) -> (i32, i32) {
    %c0_i32 = arith.constant 0 : i32
    %c0_i32_0 = arith.constant 0 : i32
    %c0_i32_1 = arith.constant 0 : i32
    return %c0_i32, %c0_i32_0 : i32, i32
  }
  func.func @transform_11(%arg0: i32) -> (i32, i32) {
    %c0_i32 = arith.constant 0 : i32
    %c0_i32_0 = arith.constant 0 : i32
    %c0_i32_1 = arith.constant 0 : i32
    return %c0_i32, %c0_i32_0 : i32, i32
  }
  func.func @transform_12(%arg0: i32) -> (i32, i32) {
    %c0_i32 = arith.constant 0 : i32
    %c0_i32_0 = arith.constant 0 : i32
    %c0_i32_1 = arith.constant 0 : i32
    return %c0_i32, %c0_i32_0 : i32, i32
  }
  func.func @transform_13(%arg0: i32) -> (i32, i32) {
    %c0_i32 = arith.constant 0 : i32
    %c0_i32_0 = arith.constant 0 : i32
    %c0_i32_1 = arith.constant 0 : i32
    return %c0_i32, %c0_i32_0 : i32, i32
  }
  func.func @transform_14(%arg0: i32) -> (i32, i32) {
    %c0_i32 = arith.constant 0 : i32
    %c0_i32_0 = arith.constant 0 : i32
    %c0_i32_1 = arith.constant 0 : i32
    return %c0_i32, %c0_i32_0 : i32, i32
  }
  func.func @transform_15(%arg0: i32) -> (i32, i32) {
    %c0_i32 = arith.constant 0 : i32
    %c0_i32_0 = arith.constant 0 : i32
    %c0_i32_1 = arith.constant 0 : i32
    return %c0_i32, %c0_i32_0 : i32, i32
  }
  func.func @transform_16(%arg0: i32) -> (i32, i32) {
    %c0_i32 = arith.constant 0 : i32
    %c0_i32_0 = arith.constant 0 : i32
    %c0_i32_1 = arith.constant 0 : i32
    return %c0_i32, %c0_i32_0 : i32, i32
  }
  func.func @transform_17(%arg0: i32) -> (i32, i32) {
    %c0_i32 = arith.constant 0 : i32
    %c0_i32_0 = arith.constant 0 : i32
    %c0_i32_1 = arith.constant 0 : i32
    return %c0_i32, %c0_i32_0 : i32, i32
  }
  func.func @transform_18(%arg0: i32) -> (i32, i32) {
    %c0_i32 = arith.constant 0 : i32
    %c0_i32_0 = arith.constant 0 : i32
    %c0_i32_1 = arith.constant 0 : i32
    return %c0_i32, %c0_i32_0 : i32, i32
  }
  func.func @transform_19(%arg0: i32) -> (i32, i32) {
    %c0_i32 = arith.constant 0 : i32
    %c0_i32_0 = arith.constant 0 : i32
    %c0_i32_1 = arith.constant 0 : i32
    return %c0_i32, %c0_i32_0 : i32, i32
  }
  func.func @transform_20(%arg0: i32) -> (i32, i32) {
    %c0_i32 = arith.constant 0 : i32
    %c0_i32_0 = arith.constant 0 : i32
    %c0_i32_1 = arith.constant 0 : i32
    return %c0_i32, %c0_i32_0 : i32, i32
  }
  func.func @transform_21(%arg0: i32) -> (i32, i32) {
    %c0_i32 = arith.constant 0 : i32
    %c0_i32_0 = arith.constant 0 : i32
    %c0_i32_1 = arith.constant 0 : i32
    return %c0_i32, %c0_i32_0 : i32, i32
  }
}

</mosaic_0001>

<llo_original>
// kernel: tpu_custom_call.1
$region0: #{tpu_custom_call.1}
  #allocation0 [shape = 'u32[]', space=smem, size = 0x4, offset = 0x4, fixed_abs, tag = 'smem constant byte address 0x4 - core index']
  #allocation1 [shape = 'u32[144,128]{1,0:T(1,128)}', space=vmem, size = 0x12000, scoped, tag = 'internal scratch']
  %s0 = inlined_call_operand.vmem [shape: f32[16,4], index: 0, kind: input, shape index: {}]
  %s1 = inlined_call_operand.vmem [shape: f32[112,8], index: 1, kind: input, shape index: {}]
  %s2 = inlined_call_operand.vmem [shape: f32[112,16], index: 2, kind: input, shape index: {}]
  %s3 = inlined_call_operand.vmem [shape: f32[16,112], index: 3, kind: input, shape index: {}]
  %s4 = inlined_call_operand.hbm [shape: f32[2,16], index: 4, kind: input, shape index: {}]
  %s5 = inlined_call_operand.vmem [shape: f32[4,1], index: 5, kind: input, shape index: {}]
  %s6 = inlined_call_operand.vmem [shape: f32[4,128], index: 6, kind: input, shape index: {}]
  %s7 = inlined_call_operand.vmem [shape: f32[128,1], index: 7, kind: input, shape index: {}]
  %s8 = inlined_call_operand.vmem [shape: f32[8,128], index: 8, kind: input, shape index: {}]
  %s9 = inlined_call_operand.vmem [shape: f32[128,128], index: 9, kind: input, shape index: {}]
  %s10 = inlined_call_operand.vmem [shape: f32[128,128], index: 10, kind: input, shape index: {}]
  %s11 = inlined_call_operand.vmem [shape: f32[128,128], index: 11, kind: input, shape index: {}]
  %s12 = inlined_call_operand.vmem [shape: f32[8,128], index: 12, kind: input, shape index: {}]
  %s13 = inlined_call_operand.vmem [shape: f32[128,128], index: 13, kind: input, shape index: {}]
  %s14 = inlined_call_operand.vmem [shape: f32[128,128], index: 14, kind: input, shape index: {}]
  %s15 = inlined_call_operand.hbm [shape: f32[128,128], index: 15, kind: input, shape index: {}]
  %s16 = inlined_call_operand.vmem [shape: f32[128,1], index: 16, kind: input, shape index: {}]
  %s17 = inlined_call_operand.hbm [shape: f32[128,128], index: 17, kind: input, shape index: {}]
  %s18 = inlined_call_operand.vmem [shape: f32[128,1], index: 18, kind: input, shape index: {}]
  %s19 = inlined_call_operand.hbm [shape: f32[16,128], index: 19, kind: output, shape index: {0}]
  %s20 = inlined_call_operand.hbm [shape: f32[16,128], index: 20, kind: output, shape index: {1}]
  %s21 = inlined_call_operand.hbm [shape: f32[2,128], index: 21, kind: output, shape index: {2}]
  %22 = xla_tuple %s19, %s20, %s21
  %s23 = sld [smem:[#allocation0]]
  $region114: #{tpu_custom_call.1} parent=0
    _
  %s25 = ssub.s32 1, %s23
  %s26 = scalar_select 0, %s25, %s23
  $region1: #{tpu_custom_call.1} parent=0
    #allocation2 [shape = 'u8[1024]{0}', space=vmem, size = 0x400, scoped, tag = 'input window, operand 4, single buffered']
    #allocation3 [shape = 's32[1]{0}', space=sflag, size = 0x4, scoped, tag = 'scoped memory for tpu_custom_call.1']
    #allocation4 [shape = 's32[1]{0}', space=sflag, size = 0x4, scoped, tag = 'scoped memory for tpu_custom_call.1']
    #allocation5 [shape = 'u8[65536]{0}', space=vmem, size = 0x10000, scoped, tag = 'input window, operand 15, single buffered']
    #allocation6 [shape = 's32[1]{0}', space=sflag, size = 0x4, scoped, tag = 'scoped memory for tpu_custom_call.1']
    #allocation7 [shape = 'u8[65536]{0}', space=vmem, size = 0x10000, scoped, tag = 'input window, operand 17, single buffered']
    #allocation8 [shape = 'u8[8192]{0}', space=vmem, size = 0x2000, scoped, tag = 'output window, operand 0, single buffered']
    #allocation9 [shape = 'u8[8192]{0}', space=vmem, size = 0x2000, scoped, tag = 'output window, operand 1, single buffered']
    #allocation10 [shape = 's32[1]{0}', space=sflag, size = 0x4, scoped, tag = 'scoped memory for tpu_custom_call.1']
    #allocation11 [shape = 'u8[1024]{0}', space=vmem, size = 0x400, scoped, tag = 'output window, operand 2, single buffered']
    %27 = vsyncpa [#allocation3], 0
    %28 = vsyncpa [#allocation6], 0
    %29 = vsyncpa [#allocation4], 0
    %30 = vsyncpa [#allocation10], 0
    // Predicated region
    $region2: #{tpu_custom_call.1} parent=1 // pred_check
      _
    $region3: #{tpu_custom_call.1} parent=1 // pred_check_branch
      %32 = sbr.rel (0) target = $region5
    $region4: #{tpu_custom_call.1} parent=1 // pred_region
      _
    $region5: #{tpu_custom_call.1} parent=1 // pred_fallthru
      _
    // Predicated region
    $region6: #{tpu_custom_call.1} parent=1 // pred_check
      _
    $region7: #{tpu_custom_call.1} parent=1 // pred_check_branch
      %34 = sbr.rel (0) target = $region9
    $region8: #{tpu_custom_call.1} parent=1 // pred_region
      _
    $region9: #{tpu_custom_call.1} parent=1 // pred_fallthru
      _
    // Predicated region
    $region10: #{tpu_custom_call.1} parent=1 // pred_check
      _
    $region11: #{tpu_custom_call.1} parent=1 // pred_check_branch
      %36 = sbr.rel (0) target = $region13
    $region12: #{tpu_custom_call.1} parent=1 // pred_region
      _
    $region13: #{tpu_custom_call.1} parent=1 // pred_fallthru
      _
    // Predicated region
    $region14: #{tpu_custom_call.1} parent=1 // pred_check
      _
    $region15: #{tpu_custom_call.1} parent=1 // pred_check_branch
      %38 = sbr.rel (0) target = $region17
    $region16: #{tpu_custom_call.1} parent=1 // pred_region
      _
    $region17: #{tpu_custom_call.1} parent=1 // pred_fallthru
      _
    // Predicated region
    $region18: #{tpu_custom_call.1} parent=1 // pred_check
      _
    $region19: #{tpu_custom_call.1} parent=1 // pred_check_branch
      %40 = sbr.rel (0) target = $region21
    $region20: #{tpu_custom_call.1} parent=1 // pred_region
      %s42 = ssub.s32 32, 32
      %43 = vsyncadd [#allocation3], %s42
      %s45 = sshll.u32 [#allocation2], 4
      %s46 = int_to_ptr.vmem [resolvable:$true] %s45
      %48 = dma.hbm_to_vmem [thread:$0]  %s4, 32, %s46, [#allocation3]
    $region21: #{tpu_custom_call.1} parent=1 // pred_fallthru
      _
    // Predicated region
    $region22: #{tpu_custom_call.1} parent=1 // pred_check
      _
    $region23: #{tpu_custom_call.1} parent=1 // pred_check_branch
      %50 = sbr.rel (0) target = $region25
    $region24: #{tpu_custom_call.1} parent=1 // pred_region
      _
    $region25: #{tpu_custom_call.1} parent=1 // pred_fallthru
      _
    // Predicated region
    $region26: #{tpu_custom_call.1} parent=1 // pred_check
      _
    $region27: #{tpu_custom_call.1} parent=1 // pred_check_branch
      %52 = sbr.rel (0) target = $region29
    $region28: #{tpu_custom_call.1} parent=1 // pred_region
      _
    $region29: #{tpu_custom_call.1} parent=1 // pred_fallthru
      _
    // Predicated region
    $region30: #{tpu_custom_call.1} parent=1 // pred_check
      _
    $region31: #{tpu_custom_call.1} parent=1 // pred_check_branch
      %54 = sbr.rel (0) target = $region33
    $region32: #{tpu_custom_call.1} parent=1 // pred_region
      _
    $region33: #{tpu_custom_call.1} parent=1 // pred_fallthru
      _
    // Predicated region
    $region34: #{tpu_custom_call.1} parent=1 // pred_check
      _
    $region35: #{tpu_custom_call.1} parent=1 // pred_check_branch
      %56 = sbr.rel (0) target = $region37
    $region36: #{tpu_custom_call.1} parent=1 // pred_region
      _
    $region37: #{tpu_custom_call.1} parent=1 // pred_fallthru
      _
    // Predicated region
    $region38: #{tpu_custom_call.1} parent=1 // pred_check
      _
    $region39: #{tpu_custom_call.1} parent=1 // pred_check_branch
      %58 = sbr.rel (0) target = $region41
    $region40: #{tpu_custom_call.1} parent=1 // pred_region
      _
    $region41: #{tpu_custom_call.1} parent=1 // pred_fallthru
      _
    // Predicated region
    $region42: #{tpu_custom_call.1} parent=1 // pred_check
      _
    $region43: #{tpu_custom_call.1} parent=1 // pred_check_branch
      %60 = sbr.rel (0) target = $region45
    $region44: #{tpu_custom_call.1} parent=1 // pred_region
      _
    $region45: #{tpu_custom_call.1} parent=1 // pred_fallthru
      _
    // Predicated region
    $region46: #{tpu_custom_call.1} parent=1 // pred_check
      _
    $region47: #{tpu_custom_call.1} parent=1 // pred_check_branch
      %62 = sbr.rel (0) target = $region49
    $region48: #{tpu_custom_call.1} parent=1 // pred_region
      _
    $region49: #{tpu_custom_call.1} parent=1 // pred_fallthru
      _
    // Predicated region
    $region50: #{tpu_custom_call.1} parent=1 // pred_check
      _
    $region51: #{tpu_custom_call.1} parent=1 // pred_check_branch
      %64 = sbr.rel (0) target = $region53
    $region52: #{tpu_custom_call.1} parent=1 // pred_region
      _
    $region53: #{tpu_custom_call.1} parent=1 // pred_fallthru
      _
    // Predicated region
    $region54: #{tpu_custom_call.1} parent=1 // pred_check
      _
    $region55: #{tpu_custom_call.1} parent=1 // pred_check_branch
      %66 = sbr.rel (0) target = $region57
    $region56: #{tpu_custom_call.1} parent=1 // pred_region
      _
    $region57: #{tpu_custom_call.1} parent=1 // pred_fallthru
      _
    // Predicated region
    $region58: #{tpu_custom_call.1} parent=1 // pred_check
      _
    $region59: #{tpu_custom_call.1} parent=1 // pred_check_branch
      %68 = sbr.rel (0) target = $region61
    $region60: #{tpu_custom_call.1} parent=1 // pred_region
      _
    $region61: #{tpu_custom_call.1} parent=1 // pred_fallthru
      _
    // Predicated region
    $region62: #{tpu_custom_call.1} parent=1 // pred_check
      _
    $region63: #{tpu_custom_call.1} parent=1 // pred_check_branch
      %70 = sbr.rel (0) target = $region65
    $region64: #{tpu_custom_call.1} parent=1 // pred_region
      %s72 = ssub.s32 2048, 2048
      %73 = vsyncadd [#allocation6], %s72
      %s74 = sshll.u32 [#allocation5], 4
      %s75 = int_to_ptr.vmem [resolvable:$true] %s74
      %80 = dma.hbm_to_vmem [thread:$0]  %s15, 2048, %s75, [#allocation6], 128, 128, 8
    $region65: #{tpu_custom_call.1} parent=1 // pred_fallthru
      _
    // Predicated region
    $region66: #{tpu_custom_call.1} parent=1 // pred_check
      _
    $region67: #{tpu_custom_call.1} parent=1 // pred_check_branch
      %82 = sbr.rel (0) target = $region69
    $region68: #{tpu_custom_call.1} parent=1 // pred_region
      _
    $region69: #{tpu_custom_call.1} parent=1 // pred_fallthru
      _
    // Predicated region
    $region70: #{tpu_custom_call.1} parent=1 // pred_check
      _
    $region71: #{tpu_custom_call.1} parent=1 // pred_check_branch
      %84 = sbr.rel (0) target = $region73
    $region72: #{tpu_custom_call.1} parent=1 // pred_region
      %s86 = ssub.s32 2048, 2048
      %87 = vsyncadd [#allocation6], %s86
      %s88 = sshll.u32 [#allocation7], 4
      %s89 = int_to_ptr.vmem [resolvable:$true] %s88
      %94 = dma.hbm_to_vmem [thread:$0]  %s17, 2048, %s89, [#allocation6], 128, 128, 8
    $region73: #{tpu_custom_call.1} parent=1 // pred_fallthru
      _
    // Predicated region
    $region74: #{tpu_custom_call.1} parent=1 // pred_check
      _
    $region75: #{tpu_custom_call.1} parent=1 // pred_check_branch
      %96 = sbr.rel (0) target = $region77
    $region76: #{tpu_custom_call.1} parent=1 // pred_region
      _
    $region77: #{tpu_custom_call.1} parent=1 // pred_fallthru
      _
    // Predicated region
    $region78: #{tpu_custom_call.1} parent=1 // pred_check
      _
    $region79: #{tpu_custom_call.1} parent=1 // pred_check_branch
      %98 = sbr.rel (0) target = $region81
    $region80: #{tpu_custom_call.1} parent=1 // pred_region
      %99 = dma.done [#allocation3], 32
    $region81: #{tpu_custom_call.1} parent=1 // pred_fallthru
      _
    // Predicated region
    $region82: #{tpu_custom_call.1} parent=1 // pred_check
      _
    $region83: #{tpu_custom_call.1} parent=1 // pred_check_branch
      %101 = sbr.rel (0) target = $region85
    $region84: #{tpu_custom_call.1} parent=1 // pred_region
      %102 = dma.done [#allocation6], 2048
    $region85: #{tpu_custom_call.1} parent=1 // pred_fallthru
      _
    // Predicated region
    $region86: #{tpu_custom_call.1} parent=1 // pred_check
      _
    $region87: #{tpu_custom_call.1} parent=1 // pred_check_branch
      %104 = sbr.rel (0) target = $region89
    $region88: #{tpu_custom_call.1} parent=1 // pred_region
      %105 = dma.done [#allocation6], 2048
    $region89: #{tpu_custom_call.1} parent=1 // pred_fallthru
      _
    %v106 = vld [vmem:[%s0] sm:$0xff]
    %v107 = vld [vmem:[%s0 + $0x8] sm:$0xff]
    %v108 = vld [vmem:[%s2] sm:$0xff]
    %v109 = vld [vmem:[%s2 + $0x8] sm:$0xff]
    %v110 = vld [vmem:[%s2 + $0x10] sm:$0xff]
    %v111 = vld [vmem:[%s2 + $0x18] sm:$0xff]
    %v112 = vld [vmem:[%s2 + $0x20] sm:$0xff]
    %v113 = vld [vmem:[%s2 + $0x28] sm:$0xff]
    %v114 = vld [vmem:[%s2 + $0x30] sm:$0xff]
    %v115 = vld [vmem:[%s2 + $0x38] sm:$0xff]
    %v116 = vld [vmem:[%s2 + $0x40] sm:$0xff]
    %v117 = vld [vmem:[%s2 + $0x48] sm:$0xff]
    %v118 = vld [vmem:[%s2 + $0x50] sm:$0xff]
    %v119 = vld [vmem:[%s2 + $0x58] sm:$0xff]
    %v120 = vld [vmem:[%s2 + $0x60] sm:$0xff]
    %v121 = vld [vmem:[%s2 + $0x68] sm:$0xff]
    %v122 = vld [vmem:[%s3] sm:$0xff]
    %v123 = vld [vmem:[%s3 + $0x8] sm:$0xff]
    %v124 = vld [vmem:[%s1] sm:$0xff]
    %v125 = vld [vmem:[%s1 + $0x8] sm:$0xff]
    %v126 = vld [vmem:[%s1 + $0x10] sm:$0xff]
    %v127 = vld [vmem:[%s1 + $0x18] sm:$0xff]
    %v128 = vld [vmem:[%s1 + $0x20] sm:$0xff]
    %v129 = vld [vmem:[%s1 + $0x28] sm:$0xff]
    %v130 = vld [vmem:[%s1 + $0x30] sm:$0xff]
    %v131 = vld [vmem:[%s1 + $0x38] sm:$0xff]
    %v132 = vld [vmem:[%s1 + $0x40] sm:$0xff]
    %v133 = vld [vmem:[%s1 + $0x48] sm:$0xff]
    %v134 = vld [vmem:[%s1 + $0x50] sm:$0xff]
    %v135 = vld [vmem:[%s1 + $0x58] sm:$0xff]
    %v136 = vld [vmem:[%s1 + $0x60] sm:$0xff]
    %v137 = vld [vmem:[%s1 + $0x68] sm:$0xff]
    %v138 = vld [vmem:[%s5] sm:$0xf]
    %vm139 = vcmask 31744
    %v141 = vsel %vm139, %v106, 0
    %v144 = vsel %vm139, %v107, 0
    %vm146 = vcmask 1043456
    %v148 = vsel %vm146, %v138, 0
    %150 = vmatprep.subr.mxu0 0.0
    %151 = vmatpush1.msra.mxu0 0.0
    %152 = vmatprep.subr.mxu0 0.0
    %153 = vmatpush1.msra.mxu0 0.0
    %154 = vmatprep.subr.mxu0 0.0
    %155 = vmatpush1.msra.mxu0 0.0
    %156 = vmatprep.subr.mxu0 0.0
    %157 = vmatpush1.msra.mxu0 0.0
    %158 = vmatprep.subr.mxu0 0.0
    %159 = vmatpush1.msra.mxu0 0.0
    %160 = vmatprep.subr.mxu0 0.0
    %161 = vmatpush1.msra.mxu0 0.0
    %162 = vmatprep.subr.mxu0 0.0
    %163 = vmatpush1.msra.mxu0 0.0
    %164 = vmatprep.subr.mxu0 0.0
    %165 = vmatpush1.msra.mxu0 0.0
    %166 = vmatprep.subr.mxu0 0.0
    %167 = vmatpush1.msra.mxu0 0.0
    %168 = vmatprep.subr.mxu0 0.0
    %169 = vmatpush1.msra.mxu0 0.0
    %170 = vmatprep.subr.mxu0 0.0
    %171 = vmatpush1.msra.mxu0 0.0
    %172 = vmatprep.subr.mxu0 0.0
    %173 = vmatpush1.msra.mxu0 0.0
    %174 = vmatprep.subr.mxu0 0.0
    %175 = vmatpush1.msra.mxu0 0.0
    %176 = vmatprep.subr.mxu0 0.0
    %177 = vmatpush1.msra.mxu0 0.0
    %178 = vmatprep.subr.mxu0 0.0
    %179 = vmatpush1.msra.mxu0 0.0
    %180 = vmatprep.subr.mxu0 0.0
    %181 = vmatpush1.msra.mxu0 %v148
    %182 = vmatprep.subr.mxu0 0.0
    %183 = vmatpush2.msra.mxu0 0.0
    %184 = vmatprep.subr.mxu0 0.0
    %185 = vmatpush2.msra.mxu0 0.0
    %186 = vmatprep.subr.mxu0 0.0
    %187 = vmatpush2.msra.mxu0 0.0
    %188 = vmatprep.subr.mxu0 0.0
    %189 = vmatpush2.msra.mxu0 0.0
    %190 = vmatprep.subr.mxu0 0.0
    %191 = vmatpush2.msra.mxu0 0.0
    %192 = vmatprep.subr.mxu0 0.0
    %193 = vmatpush2.msra.mxu0 0.0
    %194 = vmatprep.subr.mxu0 0.0
    %195 = vmatpush2.msra.mxu0 0.0
    %196 = vmatprep.subr.mxu0 0.0
    %197 = vmatpush2.msra.mxu0 0.0
    %198 = vmatprep.subr.mxu0 0.0
    %199 = vmatpush2.msra.mxu0 0.0
    %200 = vmatprep.subr.mxu0 0.0
    %201 = vmatpush2.msra.mxu0 0.0
    %202 = vmatprep.subr.mxu0 0.0
    %203 = vmatpush2.msra.mxu0 0.0
    %204 = vmatprep.subr.mxu0 0.0
    %205 = vmatpush2.msra.mxu0 0.0
    %206 = vmatprep.subr.mxu0 0.0
    %207 = vmatpush2.msra.mxu0 0.0
    %208 = vmatprep.subr.mxu0 0.0
    %209 = vmatpush2.msra.mxu0 0.0
    %210 = vmatprep.subr.mxu0 0.0
    %211 = vmatpush2.msra.mxu0 0.0
    %212 = vmatprep.subr.mxu0 0.0
    %213 = vmatpush2.msra.mxu0 0.0
    %214 = vmatprep.mubr.f32.mxu0 0.0
    %215 = vmatmul.mubr.f32.gmra.mxu0 %v141
    %v216 = vpop.f32.mrf.mxu0
    %v217 = vadd.f32 0.0, %v216
    %v218 = vpop.f32.mrf.mxu0
    %219 = vmatprep.mubr.f32.mxu0 0.0
    %220 = vmatmul.mubr.f32.gmra.mxu0 %v144
    %v221 = vpop.f32.mrf.mxu0
    %v222 = vadd.f32 0.0, %v221
    %v223 = vpop.f32.mrf.mxu0
    %224 = vdwg.mxu0
    %v225 = vld [vmem:[%s6] sm:$0xf]
    %v227 = vsel %vm146, %v225, 0
    %229 = vmatprep.subr.mxu0 0.0
    %230 = vmatpush1.msra.mxu0 0.0
    %231 = vmatprep.subr.mxu0 0.0
    %232 = vmatpush1.msra.mxu0 0.0
    %233 = vmatprep.subr.mxu0 0.0
    %234 = vmatpush1.msra.mxu0 0.0
    %235 = vmatprep.subr.mxu0 0.0
    %236 = vmatpush1.msra.mxu0 0.0
    %237 = vmatprep.subr.mxu0 0.0
    %238 = vmatpush1.msra.mxu0 0.0
    %239 = vmatprep.subr.mxu0 0.0
    %240 = vmatpush1.msra.mxu0 0.0
    %241 = vmatprep.subr.mxu0 0.0
    %242 = vmatpush1.msra.mxu0 0.0
    %243 = vmatprep.subr.mxu0 0.0
    %244 = vmatpush1.msra.mxu0 0.0
    %245 = vmatprep.subr.mxu0 0.0
    %246 = vmatpush1.msra.mxu0 0.0
    %247 = vmatprep.subr.mxu0 0.0
    %248 = vmatpush1.msra.mxu0 0.0
    %249 = vmatprep.subr.mxu0 0.0
    %250 = vmatpush1.msra.mxu0 0.0
    %251 = vmatprep.subr.mxu0 0.0
    %252 = vmatpush1.msra.mxu0 0.0
    %253 = vmatprep.subr.mxu0 0.0
    %254 = vmatpush1.msra.mxu0 0.0
    %255 = vmatprep.subr.mxu0 0.0
    %256 = vmatpush1.msra.mxu0 0.0
    %257 = vmatprep.subr.mxu0 0.0
    %258 = vmatpush1.msra.mxu0 0.0
    %259 = vmatprep.subr.mxu0 0.0
    %260 = vmatpush1.msra.mxu0 %v227
    %261 = vmatprep.subr.mxu0 0.0
    %262 = vmatpush2.msra.mxu0 0.0
    %263 = vmatprep.subr.mxu0 0.0
    %264 = vmatpush2.msra.mxu0 0.0
    %265 = vmatprep.subr.mxu0 0.0
    %266 = vmatpush2.msra.mxu0 0.0
    %267 = vmatprep.subr.mxu0 0.0
    %268 = vmatpush2.msra.mxu0 0.0
    %269 = vmatprep.subr.mxu0 0.0
    %270 = vmatpush2.msra.mxu0 0.0
    %271 = vmatprep.subr.mxu0 0.0
    %272 = vmatpush2.msra.mxu0 0.0
    %273 = vmatprep.subr.mxu0 0.0
    %274 = vmatpush2.msra.mxu0 0.0
    %275 = vmatprep.subr.mxu0 0.0
    %276 = vmatpush2.msra.mxu0 0.0
    %277 = vmatprep.subr.mxu0 0.0
    %278 = vmatpush2.msra.mxu0 0.0
    %279 = vmatprep.subr.mxu0 0.0
    %280 = vmatpush2.msra.mxu0 0.0
    %281 = vmatprep.subr.mxu0 0.0
    %282 = vmatpush2.msra.mxu0 0.0
    %283 = vmatprep.subr.mxu0 0.0
    %284 = vmatpush2.msra.mxu0 0.0
    %285 = vmatprep.subr.mxu0 0.0
    %286 = vmatpush2.msra.mxu0 0.0
    %287 = vmatprep.subr.mxu0 0.0
    %288 = vmatpush2.msra.mxu0 0.0
    %289 = vmatprep.subr.mxu0 0.0
    %290 = vmatpush2.msra.mxu0 0.0
    %291 = vmatprep.subr.mxu0 0.0
    %292 = vmatpush2.msra.mxu0 0.0
    %293 = vmatprep.mubr.f32.mxu0 0.0
    %294 = vmatmul.mubr.f32.gmra.mxu0 %v141
    %v295 = vpop.f32.mrf.mxu0
    %v296 = vadd.f32 0.0, %v295
    %v297 = vpop.f32.mrf.mxu0
    %298 = vmatprep.mubr.f32.mxu0 0.0
    %299 = vmatmul.mubr.f32.gmra.mxu0 %v144
    %v300 = vpop.f32.mrf.mxu0
    %v301 = vadd.f32 0.0, %v300
    %v302 = vpop.f32.mrf.mxu0
    %303 = vdwg.mxu0
    %vm304 = vcmask 130048
    %v306 = vsel %vm304, %v108, 0
    %v309 = vsel %vm304, %v109, 0
    %v312 = vsel %vm304, %v110, 0
    %v315 = vsel %vm304, %v111, 0
    %v318 = vsel %vm304, %v112, 0
    %v321 = vsel %vm304, %v113, 0
    %v324 = vsel %vm304, %v114, 0
    %v327 = vsel %vm304, %v115, 0
    %v330 = vsel %vm304, %v116, 0
    %v333 = vsel %vm304, %v117, 0
    %v336 = vsel %vm304, %v118, 0
    %v339 = vsel %vm304, %v119, 0
    %v342 = vsel %vm304, %v120, 0
    %v345 = vsel %vm304, %v121, 0
    %347 = vmatprep.subr.mxu0 0.0
    %348 = vmatpush1.msra.mxu0 0.0
    %349 = vmatprep.subr.mxu0 0.0
    %350 = vmatpush1.msra.mxu0 0.0
    %351 = vmatprep.subr.mxu0 0.0
    %352 = vmatpush1.msra.mxu0 0.0
    %353 = vmatprep.subr.mxu0 0.0
    %354 = vmatpush1.msra.mxu0 0.0
    %355 = vmatprep.subr.mxu0 0.0
    %356 = vmatpush1.msra.mxu0 0.0
    %357 = vmatprep.subr.mxu0 0.0
    %358 = vmatpush1.msra.mxu0 0.0
    %359 = vmatprep.subr.mxu0 0.0
    %360 = vmatpush1.msra.mxu0 0.0
    %361 = vmatprep.subr.mxu0 0.0
    %362 = vmatpush1.msra.mxu0 0.0
    %363 = vmatprep.subr.mxu0 0.0
    %364 = vmatpush1.msra.mxu0 0.0
    %365 = vmatprep.subr.mxu0 0.0
    %366 = vmatpush1.msra.mxu0 0.0
    %367 = vmatprep.subr.mxu0 0.0
    %368 = vmatpush1.msra.mxu0 0.0
    %369 = vmatprep.subr.mxu0 0.0
    %370 = vmatpush1.msra.mxu0 0.0
    %371 = vmatprep.subr.mxu0 0.0
    %372 = vmatpush1.msra.mxu0 0.0
    %373 = vmatprep.subr.mxu0 0.0
    %374 = vmatpush1.msra.mxu0 0.0
    %375 = vmatprep.subr.mxu0 0.0
    %376 = vmatpush1.msra.mxu0 %v301
    %377 = vmatprep.subr.mxu0 0.0
    %378 = vmatpush1.msra.mxu0 %v296
    %379 = vmatprep.subr.mxu0 0.0
    %380 = vmatpush2.msra.mxu0 0.0
    %381 = vmatprep.subr.mxu0 0.0
    %382 = vmatpush2.msra.mxu0 0.0
    %383 = vmatprep.subr.mxu0 0.0
    %384 = vmatpush2.msra.mxu0 0.0
    %385 = vmatprep.subr.mxu0 0.0
    %386 = vmatpush2.msra.mxu0 0.0
    %387 = vmatprep.subr.mxu0 0.0
    %388 = vmatpush2.msra.mxu0 0.0
    %389 = vmatprep.subr.mxu0 0.0
    %390 = vmatpush2.msra.mxu0 0.0
    %391 = vmatprep.subr.mxu0 0.0
    %392 = vmatpush2.msra.mxu0 0.0
    %393 = vmatprep.subr.mxu0 0.0
    %394 = vmatpush2.msra.mxu0 0.0
    %395 = vmatprep.subr.mxu0 0.0
    %396 = vmatpush2.msra.mxu0 0.0
    %397 = vmatprep.subr.mxu0 0.0
    %398 = vmatpush2.msra.mxu0 0.0
    %399 = vmatprep.subr.mxu0 0.0
    %400 = vmatpush2.msra.mxu0 0.0
    %401 = vmatprep.subr.mxu0 0.0
    %402 = vmatpush2.msra.mxu0 0.0
    %403 = vmatprep.subr.mxu0 0.0
    %404 = vmatpush2.msra.mxu0 0.0
    %405 = vmatprep.subr.mxu0 0.0
    %406 = vmatpush2.msra.mxu0 0.0
    %407 = vmatprep.subr.mxu0 0.0
    %408 = vmatpush2.msra.mxu0 0.0
    %409 = vmatprep.subr.mxu0 0.0
    %410 = vmatpush2.msra.mxu0 0.0
    %411 = vmatprep.mubr.f32.mxu0 0.0
    %412 = vmatmul.mubr.f32.gmra.mxu0 %v306
    %v413 = vpop.f32.mrf.mxu0
    %v414 = vadd.f32 0.0, %v413
    %v415 = vpop.f32.mrf.mxu0
    %416 = vmatprep.mubr.f32.mxu0 0.0
    %417 = vmatmul.mubr.f32.gmra.mxu0 %v309
    %v418 = vpop.f32.mrf.mxu0
    %v419 = vadd.f32 0.0, %v418
    %v420 = vpop.f32.mrf.mxu0
    %421 = vmatprep.mubr.f32.mxu0 0.0
    %422 = vmatmul.mubr.f32.gmra.mxu0 %v312
    %v423 = vpop.f32.mrf.mxu0
    %v424 = vadd.f32 0.0, %v423
    %v425 = vpop.f32.mrf.mxu0
    %426 = vmatprep.mubr.f32.mxu0 0.0
    %427 = vmatmul.mubr.f32.gmra.mxu0 %v315
    %v428 = vpop.f32.mrf.mxu0
    %v429 = vadd.f32 0.0, %v428
    %v430 = vpop.f32.mrf.mxu0
    %431 = vmatprep.mubr.f32.mxu0 0.0
    %432 = vmatmul.mubr.f32.gmra.mxu0 %v318
    %v433 = vpop.f32.mrf.mxu0
    %v434 = vadd.f32 0.0, %v433
    %v435 = vpop.f32.mrf.mxu0
    %436 = vmatprep.mubr.f32.mxu0 0.0
    %437 = vmatmul.mubr.f32.gmra.mxu0 %v321
    %v438 = vpop.f32.mrf.mxu0
    %v439 = vadd.f32 0.0, %v438
    %v440 = vpop.f32.mrf.mxu0
    %441 = vmatprep.mubr.f32.mxu0 0.0
    %442 = vmatmul.mubr.f32.gmra.mxu0 %v324
    %v443 = vpop.f32.mrf.mxu0
    %v444 = vadd.f32 0.0, %v443
    %v445 = vpop.f32.mrf.mxu0
    %446 = vmatprep.mubr.f32.mxu0 0.0
    %447 = vmatmul.mubr.f32.gmra.mxu0 %v327
    %v448 = vpop.f32.mrf.mxu0
    %v449 = vadd.f32 0.0, %v448
    %v450 = vpop.f32.mrf.mxu0
    %451 = vmatprep.mubr.f32.mxu0 0.0
    %452 = vmatmul.mubr.f32.gmra.mxu0 %v330
    %v453 = vpop.f32.mrf.mxu0
    %v454 = vadd.f32 0.0, %v453
    %v455 = vpop.f32.mrf.mxu0
    %456 = vmatprep.mubr.f32.mxu0 0.0
    %457 = vmatmul.mubr.f32.gmra.mxu0 %v333
    %v458 = vpop.f32.mrf.mxu0
    %v459 = vadd.f32 0.0, %v458
    %v460 = vpop.f32.mrf.mxu0
    %461 = vmatprep.mubr.f32.mxu0 0.0
    %462 = vmatmul.mubr.f32.gmra.mxu0 %v336
    %v463 = vpop.f32.mrf.mxu0
    %v464 = vadd.f32 0.0, %v463
    %v465 = vpop.f32.mrf.mxu0
    %466 = vmatprep.mubr.f32.mxu0 0.0
    %467 = vmatmul.mubr.f32.gmra.mxu0 %v339
    %v468 = vpop.f32.mrf.mxu0
    %v469 = vadd.f32 0.0, %v468
    %v470 = vpop.f32.mrf.mxu0
    %471 = vmatprep.mubr.f32.mxu0 0.0
    %472 = vmatmul.mubr.f32.gmra.mxu0 %v342
    %v473 = vpop.f32.mrf.mxu0
    %v474 = vadd.f32 0.0, %v473
    %v475 = vpop.f32.mrf.mxu0
    %476 = vmatprep.mubr.f32.mxu0 0.0
    %477 = vmatmul.mubr.f32.gmra.mxu0 %v345
    %v478 = vpop.f32.mrf.mxu0
    %v479 = vadd.f32 0.0, %v478
    %v480 = vpop.f32.mrf.mxu0
    %481 = vdwg.mxu0
    %v482 = vld [vmem:[%s8] sm:$0xff]
    %vm483 = vcmask 64512
    %v485 = vsel %vm483, %v124, 0
    %v488 = vsel %vm483, %v125, 0
    %v491 = vsel %vm483, %v126, 0
    %v494 = vsel %vm483, %v127, 0
    %v497 = vsel %vm483, %v128, 0
    %v500 = vsel %vm483, %v129, 0
    %v503 = vsel %vm483, %v130, 0
    %v506 = vsel %vm483, %v131, 0
    %v509 = vsel %vm483, %v132, 0
    %v512 = vsel %vm483, %v133, 0
    %v515 = vsel %vm483, %v134, 0
    %v518 = vsel %vm483, %v135, 0
    %v521 = vsel %vm483, %v136, 0
    %v524 = vsel %vm483, %v137, 0
    %526 = vmatprep.subr.mxu0 0.0
    %527 = vmatpush1.msra.mxu0 0.0
    %528 = vmatprep.subr.mxu0 0.0
    %529 = vmatpush1.msra.mxu0 0.0
    %530 = vmatprep.subr.mxu0 0.0
    %531 = vmatpush1.msra.mxu0 0.0
    %532 = vmatprep.subr.mxu0 0.0
    %533 = vmatpush1.msra.mxu0 0.0
    %534 = vmatprep.subr.mxu0 0.0
    %535 = vmatpush1.msra.mxu0 0.0
    %536 = vmatprep.subr.mxu0 0.0
    %537 = vmatpush1.msra.mxu0 0.0
    %538 = vmatprep.subr.mxu0 0.0
    %539 = vmatpush1.msra.mxu0 0.0
    %540 = vmatprep.subr.mxu0 0.0
    %541 = vmatpush1.msra.mxu0 0.0
    %542 = vmatprep.subr.mxu0 0.0
    %543 = vmatpush1.msra.mxu0 0.0
    %544 = vmatprep.subr.mxu0 0.0
    %545 = vmatpush1.msra.mxu0 0.0
    %546 = vmatprep.subr.mxu0 0.0
    %547 = vmatpush1.msra.mxu0 0.0
    %548 = vmatprep.subr.mxu0 0.0
    %549 = vmatpush1.msra.mxu0 0.0
    %550 = vmatprep.subr.mxu0 0.0
    %551 = vmatpush1.msra.mxu0 0.0
    %552 = vmatprep.subr.mxu0 0.0
    %553 = vmatpush1.msra.mxu0 0.0
    %554 = vmatprep.subr.mxu0 0.0
    %555 = vmatpush1.msra.mxu0 0.0
    %556 = vmatprep.subr.mxu0 0.0
    %557 = vmatpush1.msra.mxu0 %v482
    %558 = vmatprep.subr.mxu0 0.0
    %559 = vmatpush2.msra.mxu0 0.0
    %560 = vmatprep.subr.mxu0 0.0
    %561 = vmatpush2.msra.mxu0 0.0
    %562 = vmatprep.subr.mxu0 0.0
    %563 = vmatpush2.msra.mxu0 0.0
    %564 = vmatprep.subr.mxu0 0.0
    %565 = vmatpush2.msra.mxu0 0.0
    %566 = vmatprep.subr.mxu0 0.0
    %567 = vmatpush2.msra.mxu0 0.0
    %568 = vmatprep.subr.mxu0 0.0
    %569 = vmatpush2.msra.mxu0 0.0
    %570 = vmatprep.subr.mxu0 0.0
    %571 = vmatpush2.msra.mxu0 0.0
    %572 = vmatprep.subr.mxu0 0.0
    %573 = vmatpush2.msra.mxu0 0.0
    %574 = vmatprep.subr.mxu0 0.0
    %575 = vmatpush2.msra.mxu0 0.0
    %576 = vmatprep.subr.mxu0 0.0
    %577 = vmatpush2.msra.mxu0 0.0
    %578 = vmatprep.subr.mxu0 0.0
    %579 = vmatpush2.msra.mxu0 0.0
    %580 = vmatprep.subr.mxu0 0.0
    %581 = vmatpush2.msra.mxu0 0.0
    %582 = vmatprep.subr.mxu0 0.0
    %583 = vmatpush2.msra.mxu0 0.0
    %584 = vmatprep.subr.mxu0 0.0
    %585 = vmatpush2.msra.mxu0 0.0
    %586 = vmatprep.subr.mxu0 0.0
    %587 = vmatpush2.msra.mxu0 0.0
    %588 = vmatprep.subr.mxu0 0.0
    %589 = vmatpush2.msra.mxu0 0.0
    %590 = vmatprep.mubr.f32.mxu0 0.0
    %591 = vmatmul.mubr.f32.gmra.mxu0 %v485
    %v592 = vpop.f32.mrf.mxu0
    %v593 = vadd.f32 0.0, %v592
    %v594 = vpop.f32.mrf.mxu0
    %595 = vmatprep.mubr.f32.mxu0 0.0
    %596 = vmatmul.mubr.f32.gmra.mxu0 %v488
    %v597 = vpop.f32.mrf.mxu0
    %v598 = vadd.f32 0.0, %v597
    %v599 = vpop.f32.mrf.mxu0
    %600 = vmatprep.mubr.f32.mxu0 0.0
    %601 = vmatmul.mubr.f32.gmra.mxu0 %v491
    %v602 = vpop.f32.mrf.mxu0
    %v603 = vadd.f32 0.0, %v602
    %v604 = vpop.f32.mrf.mxu0
    %605 = vmatprep.mubr.f32.mxu0 0.0
    %606 = vmatmul.mubr.f32.gmra.mxu0 %v494
    %v607 = vpop.f32.mrf.mxu0
    %v608 = vadd.f32 0.0, %v607
    %v609 = vpop.f32.mrf.mxu0
    %610 = vmatprep.mubr.f32.mxu0 0.0
    %611 = vmatmul.mubr.f32.gmra.mxu0 %v497
    %v612 = vpop.f32.mrf.mxu0
    %v613 = vadd.f32 0.0, %v612
    %v614 = vpop.f32.mrf.mxu0
    %615 = vmatprep.mubr.f32.mxu0 0.0
    %616 = vmatmul.mubr.f32.gmra.mxu0 %v500
    %v617 = vpop.f32.mrf.mxu0
    %v618 = vadd.f32 0.0, %v617
    %v619 = vpop.f32.mrf.mxu0
    %620 = vmatprep.mubr.f32.mxu0 0.0
    %621 = vmatmul.mubr.f32.gmra.mxu0 %v503
    %v622 = vpop.f32.mrf.mxu0
    %v623 = vadd.f32 0.0, %v622
    %v624 = vpop.f32.mrf.mxu0
    %625 = vmatprep.mubr.f32.mxu0 0.0
    %626 = vmatmul.mubr.f32.gmra.mxu0 %v506
    %v627 = vpop.f32.mrf.mxu0
    %v628 = vadd.f32 0.0, %v627
    %v629 = vpop.f32.mrf.mxu0
    %630 = vmatprep.mubr.f32.mxu0 0.0
    %631 = vmatmul.mubr.f32.gmra.mxu0 %v509
    %v632 = vpop.f32.mrf.mxu0
    %v633 = vadd.f32 0.0, %v632
    %v634 = vpop.f32.mrf.mxu0
    %635 = vmatprep.mubr.f32.mxu0 0.0
    %636 = vmatmul.mubr.f32.gmra.mxu0 %v512
    %v637 = vpop.f32.mrf.mxu0
    %v638 = vadd.f32 0.0, %v637
    %v639 = vpop.f32.mrf.mxu0
    %640 = vmatprep.mubr.f32.mxu0 0.0
    %641 = vmatmul.mubr.f32.gmra.mxu0 %v515
    %v642 = vpop.f32.mrf.mxu0
    %v643 = vadd.f32 0.0, %v642
    %v644 = vpop.f32.mrf.mxu0
    %645 = vmatprep.mubr.f32.mxu0 0.0
    %646 = vmatmul.mubr.f32.gmra.mxu0 %v518
    %v647 = vpop.f32.mrf.mxu0
    %v648 = vadd.f32 0.0, %v647
    %v649 = vpop.f32.mrf.mxu0
    %650 = vmatprep.mubr.f32.mxu0 0.0
    %651 = vmatmul.mubr.f32.gmra.mxu0 %v521
    %v652 = vpop.f32.mrf.mxu0
    %v653 = vadd.f32 0.0, %v652
    %v654 = vpop.f32.mrf.mxu0
    %655 = vmatprep.mubr.f32.mxu0 0.0
    %656 = vmatmul.mubr.f32.gmra.mxu0 %v524
    %v657 = vpop.f32.mrf.mxu0
    %v658 = vadd.f32 0.0, %v657
    %v659 = vpop.f32.mrf.mxu0
    %660 = vdwg.mxu0
    %v661 = vmul.f32 %v414, %v593
    %v662 = vmul.f32 %v419, %v598
    %v663 = vmul.f32 %v424, %v603
    %v664 = vmul.f32 %v429, %v608
    %v665 = vmul.f32 %v434, %v613
    %v666 = vmul.f32 %v439, %v618
    %v667 = vmul.f32 %v444, %v623
    %v668 = vmul.f32 %v449, %v628
    %v669 = vmul.f32 %v454, %v633
    %v670 = vmul.f32 %v459, %v638
    %v671 = vmul.f32 %v464, %v643
    %v672 = vmul.f32 %v469, %v648
    %v673 = vmul.f32 %v474, %v653
    %v674 = vmul.f32 %v479, %v658
    %vm675 = vcmask 916480
    %v677 = vsel %vm675, %v122, 0
    %v680 = vsel %vm675, %v123, 0
    %682 = vmatprep.subr.mxu0 0.0
    %683 = vmatpush1.msra.mxu0 0.0
    %684 = vmatprep.subr.mxu0 0.0
    %685 = vmatpush1.msra.mxu0 0.0
    %686 = vmatprep.subr.mxu0 0.0
    %687 = vmatpush1.msra.mxu0 %v674
    %688 = vmatprep.subr.mxu0 0.0
    %689 = vmatpush1.msra.mxu0 %v673
    %690 = vmatprep.subr.mxu0 0.0
    %691 = vmatpush1.msra.mxu0 %v672
    %692 = vmatprep.subr.mxu0 0.0
    %693 = vmatpush1.msra.mxu0 %v671
    %694 = vmatprep.subr.mxu0 0.0
    %695 = vmatpush1.msra.mxu0 %v670
    %696 = vmatprep.subr.mxu0 0.0
    %697 = vmatpush1.msra.mxu0 %v669
    %698 = vmatprep.subr.mxu0 0.0
    %699 = vmatpush1.msra.mxu0 %v668
    %700 = vmatprep.subr.mxu0 0.0
    %701 = vmatpush1.msra.mxu0 %v667
    %702 = vmatprep.subr.mxu0 0.0
    %703 = vmatpush1.msra.mxu0 %v666
    %704 = vmatprep.subr.mxu0 0.0
    %705 = vmatpush1.msra.mxu0 %v665
    %706 = vmatprep.subr.mxu0 0.0
    %707 = vmatpush1.msra.mxu0 %v664
    %708 = vmatprep.subr.mxu0 0.0
    %709 = vmatpush1.msra.mxu0 %v663
    %710 = vmatprep.subr.mxu0 0.0
    %711 = vmatpush1.msra.mxu0 %v662
    %712 = vmatprep.subr.mxu0 0.0
    %713 = vmatpush1.msra.mxu0 %v661
    %714 = vmatprep.subr.mxu0 0.0
    %715 = vmatpush2.msra.mxu0 0.0
    %716 = vmatprep.subr.mxu0 0.0
    %717 = vmatpush2.msra.mxu0 0.0
    %718 = vmatprep.subr.mxu0 0.0
    %719 = vmatpush2.msra.mxu0 0.0
    %720 = vmatprep.subr.mxu0 0.0
    %721 = vmatpush2.msra.mxu0 0.0
    %722 = vmatprep.subr.mxu0 0.0
    %723 = vmatpush2.msra.mxu0 0.0
    %724 = vmatprep.subr.mxu0 0.0
    %725 = vmatpush2.msra.mxu0 0.0
    %726 = vmatprep.subr.mxu0 0.0
    %727 = vmatpush2.msra.mxu0 0.0
    %728 = vmatprep.subr.mxu0 0.0
    %729 = vmatpush2.msra.mxu0 0.0
    %730 = vmatprep.subr.mxu0 0.0
    %731 = vmatpush2.msra.mxu0 0.0
    %732 = vmatprep.subr.mxu0 0.0
    %733 = vmatpush2.msra.mxu0 0.0
    %734 = vmatprep.subr.mxu0 0.0
    %735 = vmatpush2.msra.mxu0 0.0
    %736 = vmatprep.subr.mxu0 0.0
    %737 = vmatpush2.msra.mxu0 0.0
    %738 = vmatprep.subr.mxu0 0.0
    %739 = vmatpush2.msra.mxu0 0.0
    %740 = vmatprep.subr.mxu0 0.0
    %741 = vmatpush2.msra.mxu0 0.0
    %742 = vmatprep.subr.mxu0 0.0
    %743 = vmatpush2.msra.mxu0 0.0
    %744 = vmatprep.subr.mxu0 0.0
    %745 = vmatpush2.msra.mxu0 0.0
    %746 = vmatprep.mubr.f32.mxu0 0.0
    %747 = vmatmul.mubr.f32.gmra.mxu0 %v677
    %v748 = vpop.f32.mrf.mxu0
    %v749 = vadd.f32 0.0, %v748
    %v750 = vpop.f32.mrf.mxu0
    %751 = vmatprep.mubr.f32.mxu0 0.0
    %752 = vmatmul.mubr.f32.gmra.mxu0 %v680
    %v753 = vpop.f32.mrf.mxu0
    %v754 = vadd.f32 0.0, %v753
    %v755 = vpop.f32.mrf.mxu0
    %756 = vdwg.mxu0
    %v757 = vmul.f32 %v749, 0.14285715
    %v758 = vmul.f32 %v754, 0.14285715
    %v759 = vld [vmem:[%s9] sm:$0xff]
    %v760 = vld [vmem:[%s9 + $0x8] sm:$0xff]
    %v761 = vld [vmem:[%s9 + $0x10] sm:$0xff]
    %v762 = vld [vmem:[%s9 + $0x18] sm:$0xff]
    %v763 = vld [vmem:[%s9 + $0x20] sm:$0xff]
    %v764 = vld [vmem:[%s9 + $0x28] sm:$0xff]
    %v765 = vld [vmem:[%s9 + $0x30] sm:$0xff]
    %v766 = vld [vmem:[%s9 + $0x38] sm:$0xff]
    %v767 = vld [vmem:[%s9 + $0x40] sm:$0xff]
    %v768 = vld [vmem:[%s9 + $0x48] sm:$0xff]
    %v769 = vld [vmem:[%s9 + $0x50] sm:$0xff]
    %v770 = vld [vmem:[%s9 + $0x58] sm:$0xff]
    %v771 = vld [vmem:[%s9 + $0x60] sm:$0xff]
    %v772 = vld [vmem:[%s9 + $0x68] sm:$0xff]
    %v773 = vld [vmem:[%s9 + $0x70] sm:$0xff]
    %v774 = vld [vmem:[%s9 + $0x78] sm:$0xff]
    %775 = vmatprep.subr.mxu0 0.0
    %776 = vmatpush1.msra.mxu0 %v774
    %777 = vmatprep.subr.mxu0 0.0
    %778 = vmatpush1.msra.mxu0 %v773
    %779 = vmatprep.subr.mxu0 0.0
    %780 = vmatpush1.msra.mxu0 %v772
    %781 = vmatprep.subr.mxu0 0.0
    %782 = vmatpush1.msra.mxu0 %v771
    %783 = vmatprep.subr.mxu0 0.0
    %784 = vmatpush1.msra.mxu0 %v770
    %785 = vmatprep.subr.mxu0 0.0
    %786 = vmatpush1.msra.mxu0 %v769
    %787 = vmatprep.subr.mxu0 0.0
    %788 = vmatpush1.msra.mxu0 %v768
    %789 = vmatprep.subr.mxu0 0.0
    %790 = vmatpush1.msra.mxu0 %v767
    %791 = vmatprep.subr.mxu0 0.0
    %792 = vmatpush1.msra.mxu0 %v766
    %793 = vmatprep.subr.mxu0 0.0
    %794 = vmatpush1.msra.mxu0 %v765
    %795 = vmatprep.subr.mxu0 0.0
    %796 = vmatpush1.msra.mxu0 %v764
    %797 = vmatprep.subr.mxu0 0.0
    %798 = vmatpush1.msra.mxu0 %v763
    %799 = vmatprep.subr.mxu0 0.0
    %800 = vmatpush1.msra.mxu0 %v762
    %801 = vmatprep.subr.mxu0 0.0
    %802 = vmatpush1.msra.mxu0 %v761
    %803 = vmatprep.subr.mxu0 0.0
    %804 = vmatpush1.msra.mxu0 %v760
    %805 = vmatprep.subr.mxu0 0.0
    %806 = vmatpush1.msra.mxu0 %v759
    %807 = vmatprep.subr.mxu0 0.0
    %808 = vmatpush2.msra.mxu0 0.0
    %809 = vmatprep.subr.mxu0 0.0
    %810 = vmatpush2.msra.mxu0 0.0
    %811 = vmatprep.subr.mxu0 0.0
    %812 = vmatpush2.msra.mxu0 0.0
    %813 = vmatprep.subr.mxu0 0.0
    %814 = vmatpush2.msra.mxu0 0.0
    %815 = vmatprep.subr.mxu0 0.0
    %816 = vmatpush2.msra.mxu0 0.0
    %817 = vmatprep.subr.mxu0 0.0
    %818 = vmatpush2.msra.mxu0 0.0
    %819 = vmatprep.subr.mxu0 0.0
    %820 = vmatpush2.msra.mxu0 0.0
    %821 = vmatprep.subr.mxu0 0.0
    %822 = vmatpush2.msra.mxu0 0.0
    %823 = vmatprep.subr.mxu0 0.0
    %824 = vmatpush2.msra.mxu0 0.0
    %825 = vmatprep.subr.mxu0 0.0
    %826 = vmatpush2.msra.mxu0 0.0
    %827 = vmatprep.subr.mxu0 0.0
    %828 = vmatpush2.msra.mxu0 0.0
    %829 = vmatprep.subr.mxu0 0.0
    %830 = vmatpush2.msra.mxu0 0.0
    %831 = vmatprep.subr.mxu0 0.0
    %832 = vmatpush2.msra.mxu0 0.0
    %833 = vmatprep.subr.mxu0 0.0
    %834 = vmatpush2.msra.mxu0 0.0
    %835 = vmatprep.subr.mxu0 0.0
    %836 = vmatpush2.msra.mxu0 0.0
    %837 = vmatprep.subr.mxu0 0.0
    %838 = vmatpush2.msra.mxu0 0.0
    %839 = vmatprep.mubr.f32.mxu0 0.0
    %840 = vmatmul.mubr.f32.gmra.mxu0 %v757
    %v841 = vpop.f32.mrf.mxu0
    %v842 = vadd.f32 0.0, %v841
    %v843 = vpop.f32.mrf.mxu0
    %844 = vmatprep.mubr.f32.mxu0 0.0
    %845 = vmatmul.mubr.f32.gmra.mxu0 %v758
    %v846 = vpop.f32.mrf.mxu0
    %v847 = vadd.f32 0.0, %v846
    %v848 = vpop.f32.mrf.mxu0
    %849 = vdwg.mxu0
    %v850 = vld [vmem:[%s10] sm:$0xff]
    %v851 = vld [vmem:[%s10 + $0x8] sm:$0xff]
    %v852 = vld [vmem:[%s10 + $0x10] sm:$0xff]
    %v853 = vld [vmem:[%s10 + $0x18] sm:$0xff]
    %v854 = vld [vmem:[%s10 + $0x20] sm:$0xff]
    %v855 = vld [vmem:[%s10 + $0x28] sm:$0xff]
    %v856 = vld [vmem:[%s10 + $0x30] sm:$0xff]
    %v857 = vld [vmem:[%s10 + $0x38] sm:$0xff]
    %v858 = vld [vmem:[%s10 + $0x40] sm:$0xff]
    %v859 = vld [vmem:[%s10 + $0x48] sm:$0xff]
    %v860 = vld [vmem:[%s10 + $0x50] sm:$0xff]
    %v861 = vld [vmem:[%s10 + $0x58] sm:$0xff]
    %v862 = vld [vmem:[%s10 + $0x60] sm:$0xff]
    %v863 = vld [vmem:[%s10 + $0x68] sm:$0xff]
    %v864 = vld [vmem:[%s10 + $0x70] sm:$0xff]
    %v865 = vld [vmem:[%s10 + $0x78] sm:$0xff]
    %866 = vmatprep.subr.mxu0 0.0
    %867 = vmatpush1.msra.mxu0 %v865
    %868 = vmatprep.subr.mxu0 0.0
    %869 = vmatpush1.msra.mxu0 %v864
    %870 = vmatprep.subr.mxu0 0.0
    %871 = vmatpush1.msra.mxu0 %v863
    %872 = vmatprep.subr.mxu0 0.0
    %873 = vmatpush1.msra.mxu0 %v862
    %874 = vmatprep.subr.mxu0 0.0
    %875 = vmatpush1.msra.mxu0 %v861
    %876 = vmatprep.subr.mxu0 0.0
    %877 = vmatpush1.msra.mxu0 %v860
    %878 = vmatprep.subr.mxu0 0.0
    %879 = vmatpush1.msra.mxu0 %v859
    %880 = vmatprep.subr.mxu0 0.0
    %881 = vmatpush1.msra.mxu0 %v858
    %882 = vmatprep.subr.mxu0 0.0
    %883 = vmatpush1.msra.mxu0 %v857
    %884 = vmatprep.subr.mxu0 0.0
    %885 = vmatpush1.msra.mxu0 %v856
    %886 = vmatprep.subr.mxu0 0.0
    %887 = vmatpush1.msra.mxu0 %v855
    %888 = vmatprep.subr.mxu0 0.0
    %889 = vmatpush1.msra.mxu0 %v854
    %890 = vmatprep.subr.mxu0 0.0
    %891 = vmatpush1.msra.mxu0 %v853
    %892 = vmatprep.subr.mxu0 0.0
    %893 = vmatpush1.msra.mxu0 %v852
    %894 = vmatprep.subr.mxu0 0.0
    %895 = vmatpush1.msra.mxu0 %v851
    %896 = vmatprep.subr.mxu0 0.0
    %897 = vmatpush1.msra.mxu0 %v850
    %898 = vmatprep.subr.mxu0 0.0
    %899 = vmatpush2.msra.mxu0 0.0
    %900 = vmatprep.subr.mxu0 0.0
    %901 = vmatpush2.msra.mxu0 0.0
    %902 = vmatprep.subr.mxu0 0.0
    %903 = vmatpush2.msra.mxu0 0.0
    %904 = vmatprep.subr.mxu0 0.0
    %905 = vmatpush2.msra.mxu0 0.0
    %906 = vmatprep.subr.mxu0 0.0
    %907 = vmatpush2.msra.mxu0 0.0
    %908 = vmatprep.subr.mxu0 0.0
    %909 = vmatpush2.msra.mxu0 0.0
    %910 = vmatprep.subr.mxu0 0.0
    %911 = vmatpush2.msra.mxu0 0.0
    %912 = vmatprep.subr.mxu0 0.0
    %913 = vmatpush2.msra.mxu0 0.0
    %914 = vmatprep.subr.mxu0 0.0
    %915 = vmatpush2.msra.mxu0 0.0
    %916 = vmatprep.subr.mxu0 0.0
    %917 = vmatpush2.msra.mxu0 0.0
    %918 = vmatprep.subr.mxu0 0.0
    %919 = vmatpush2.msra.mxu0 0.0
    %920 = vmatprep.subr.mxu0 0.0
    %921 = vmatpush2.msra.mxu0 0.0
    %922 = vmatprep.subr.mxu0 0.0
    %923 = vmatpush2.msra.mxu0 0.0
    %924 = vmatprep.subr.mxu0 0.0
    %925 = vmatpush2.msra.mxu0 0.0
    %926 = vmatprep.subr.mxu0 0.0
    %927 = vmatpush2.msra.mxu0 0.0
    %928 = vmatprep.subr.mxu0 0.0
    %929 = vmatpush2.msra.mxu0 0.0
    %930 = vmatprep.mubr.f32.mxu0 0.0
    %931 = vmatmul.mubr.f32.gmra.mxu0 %v296
    %v932 = vpop.f32.mrf.mxu0
    %v933 = vadd.f32 0.0, %v932
    %v934 = vpop.f32.mrf.mxu0
    %935 = vmatprep.mubr.f32.mxu0 0.0
    %936 = vmatmul.mubr.f32.gmra.mxu0 %v301
    %v937 = vpop.f32.mrf.mxu0
    %v938 = vadd.f32 0.0, %v937
    %v939 = vpop.f32.mrf.mxu0
    %940 = vdwg.mxu0
    %v941 = vld [vmem:[%s11] sm:$0xff]
    %v942 = vld [vmem:[%s11 + $0x8] sm:$0xff]
    %v943 = vld [vmem:[%s11 + $0x10] sm:$0xff]
    %v944 = vld [vmem:[%s11 + $0x18] sm:$0xff]
    %v945 = vld [vmem:[%s11 + $0x20] sm:$0xff]
    %v946 = vld [vmem:[%s11 + $0x28] sm:$0xff]
    %v947 = vld [vmem:[%s11 + $0x30] sm:$0xff]
    %v948 = vld [vmem:[%s11 + $0x38] sm:$0xff]
    %v949 = vld [vmem:[%s11 + $0x40] sm:$0xff]
    %v950 = vld [vmem:[%s11 + $0x48] sm:$0xff]
    %v951 = vld [vmem:[%s11 + $0x50] sm:$0xff]
    %v952 = vld [vmem:[%s11 + $0x58] sm:$0xff]
    %v953 = vld [vmem:[%s11 + $0x60] sm:$0xff]
    %v954 = vld [vmem:[%s11 + $0x68] sm:$0xff]
    %v955 = vld [vmem:[%s11 + $0x70] sm:$0xff]
    %v956 = vld [vmem:[%s11 + $0x78] sm:$0xff]
    %957 = vmatprep.subr.mxu0 0.0
    %958 = vmatpush1.msra.mxu0 %v956
    %959 = vmatprep.subr.mxu0 0.0
    %960 = vmatpush1.msra.mxu0 %v955
    %961 = vmatprep.subr.mxu0 0.0
    %962 = vmatpush1.msra.mxu0 %v954
    %963 = vmatprep.subr.mxu0 0.0
    %964 = vmatpush1.msra.mxu0 %v953
    %965 = vmatprep.subr.mxu0 0.0
    %966 = vmatpush1.msra.mxu0 %v952
    %967 = vmatprep.subr.mxu0 0.0
    %968 = vmatpush1.msra.mxu0 %v951
    %969 = vmatprep.subr.mxu0 0.0
    %970 = vmatpush1.msra.mxu0 %v950
    %971 = vmatprep.subr.mxu0 0.0
    %972 = vmatpush1.msra.mxu0 %v949
    %973 = vmatprep.subr.mxu0 0.0
    %974 = vmatpush1.msra.mxu0 %v948
    %975 = vmatprep.subr.mxu0 0.0
    %976 = vmatpush1.msra.mxu0 %v947
    %977 = vmatprep.subr.mxu0 0.0
    %978 = vmatpush1.msra.mxu0 %v946
    %979 = vmatprep.subr.mxu0 0.0
    %980 = vmatpush1.msra.mxu0 %v945
    %981 = vmatprep.subr.mxu0 0.0
    %982 = vmatpush1.msra.mxu0 %v944
    %983 = vmatprep.subr.mxu0 0.0
    %984 = vmatpush1.msra.mxu0 %v943
    %985 = vmatprep.subr.mxu0 0.0
    %986 = vmatpush1.msra.mxu0 %v942
    %987 = vmatprep.subr.mxu0 0.0
    %988 = vmatpush1.msra.mxu0 %v941
    %989 = vmatprep.subr.mxu0 0.0
    %990 = vmatpush2.msra.mxu0 0.0
    %991 = vmatprep.subr.mxu0 0.0
    %992 = vmatpush2.msra.mxu0 0.0
    %993 = vmatprep.subr.mxu0 0.0
    %994 = vmatpush2.msra.mxu0 0.0
    %995 = vmatprep.subr.mxu0 0.0
    %996 = vmatpush2.msra.mxu0 0.0
    %997 = vmatprep.subr.mxu0 0.0
    %998 = vmatpush2.msra.mxu0 0.0
    %999 = vmatprep.subr.mxu0 0.0
    %1000 = vmatpush2.msra.mxu0 0.0
    %1001 = vmatprep.subr.mxu0 0.0
    %1002 = vmatpush2.msra.mxu0 0.0
    %1003 = vmatprep.subr.mxu0 0.0
    %1004 = vmatpush2.msra.mxu0 0.0
    %1005 = vmatprep.subr.mxu0 0.0
    %1006 = vmatpush2.msra.mxu0 0.0
    %1007 = vmatprep.subr.mxu0 0.0
    %1008 = vmatpush2.msra.mxu0 0.0
    %1009 = vmatprep.subr.mxu0 0.0
    %1010 = vmatpush2.msra.mxu0 0.0
    %1011 = vmatprep.subr.mxu0 0.0
    %1012 = vmatpush2.msra.mxu0 0.0
    %1013 = vmatprep.subr.mxu0 0.0
    %1014 = vmatpush2.msra.mxu0 0.0
    %1015 = vmatprep.subr.mxu0 0.0
    %1016 = vmatpush2.msra.mxu0 0.0
    %1017 = vmatprep.subr.mxu0 0.0
    %1018 = vmatpush2.msra.mxu0 0.0
    %1019 = vmatprep.subr.mxu0 0.0
    %1020 = vmatpush2.msra.mxu0 0.0
    %1021 = vmatprep.mubr.f32.mxu0 0.0
    %1022 = vmatmul.mubr.f32.gmra.mxu0 %v842
    %v1023 = vpop.f32.mrf.mxu0
    %v1024 = vadd.f32 %v933, %v1023
    %v1025 = vpop.f32.mrf.mxu0
    %1026 = vmatprep.mubr.f32.mxu0 0.0
    %1027 = vmatmul.mubr.f32.gmra.mxu0 %v847
    %v1028 = vpop.f32.mrf.mxu0
    %v1029 = vadd.f32 %v938, %v1028
    %v1030 = vpop.f32.mrf.mxu0
    %1031 = vdwg.mxu0
    %v1032 = vld [vmem:[%s16] sm:$0xff]
    %v1033 = vld [vmem:[%s16 + $0x8] sm:$0xff]
    %v1034 = vld [vmem:[%s16 + $0x10] sm:$0xff]
    %v1035 = vld [vmem:[%s16 + $0x18] sm:$0xff]
    %v1036 = vld [vmem:[%s16 + $0x20] sm:$0xff]
    %v1037 = vld [vmem:[%s16 + $0x28] sm:$0xff]
    %v1038 = vld [vmem:[%s16 + $0x30] sm:$0xff]
    %v1039 = vld [vmem:[%s16 + $0x38] sm:$0xff]
    %v1040 = vld [vmem:[%s16 + $0x40] sm:$0xff]
    %v1041 = vld [vmem:[%s16 + $0x48] sm:$0xff]
    %v1042 = vld [vmem:[%s16 + $0x50] sm:$0xff]
    %v1043 = vld [vmem:[%s16 + $0x58] sm:$0xff]
    %v1044 = vld [vmem:[%s16 + $0x60] sm:$0xff]
    %v1045 = vld [vmem:[%s16 + $0x68] sm:$0xff]
    %v1046 = vld [vmem:[%s16 + $0x70] sm:$0xff]
    %v1047 = vld [vmem:[%s16 + $0x78] sm:$0xff]
    %1048 = vmatprep.subr.mxu0 0.0
    %1049 = vmatpush1.msra.mxu0 %v1047
    %1050 = vmatprep.subr.mxu0 0.0
    %1051 = vmatpush1.msra.mxu0 %v1046
    %1052 = vmatprep.subr.mxu0 0.0
    %1053 = vmatpush1.msra.mxu0 %v1045
    %1054 = vmatprep.subr.mxu0 0.0
    %1055 = vmatpush1.msra.mxu0 %v1044
    %1056 = vmatprep.subr.mxu0 0.0
    %1057 = vmatpush1.msra.mxu0 %v1043
    %1058 = vmatprep.subr.mxu0 0.0
    %1059 = vmatpush1.msra.mxu0 %v1042
    %1060 = vmatprep.subr.mxu0 0.0
    %1061 = vmatpush1.msra.mxu0 %v1041
    %1062 = vmatprep.subr.mxu0 0.0
    %1063 = vmatpush1.msra.mxu0 %v1040
    %1064 = vmatprep.subr.mxu0 0.0
    %1065 = vmatpush1.msra.mxu0 %v1039
    %1066 = vmatprep.subr.mxu0 0.0
    %1067 = vmatpush1.msra.mxu0 %v1038
    %1068 = vmatprep.subr.mxu0 0.0
    %1069 = vmatpush1.msra.mxu0 %v1037
    %1070 = vmatprep.subr.mxu0 0.0
    %1071 = vmatpush1.msra.mxu0 %v1036
    %1072 = vmatprep.subr.mxu0 0.0
    %1073 = vmatpush1.msra.mxu0 %v1035
    %1074 = vmatprep.subr.mxu0 0.0
    %1075 = vmatpush1.msra.mxu0 %v1034
    %1076 = vmatprep.subr.mxu0 0.0
    %1077 = vmatpush1.msra.mxu0 %v1033
    %1078 = vmatprep.subr.mxu0 0.0
    %1079 = vmatpush1.msra.mxu0 %v1032
    %1080 = vmatprep.subr.mxu0 0.0
    %1081 = vmatpush2.msra.mxu0 0.0
    %1082 = vmatprep.subr.mxu0 0.0
    %1083 = vmatpush2.msra.mxu0 0.0
    %1084 = vmatprep.subr.mxu0 0.0
    %1085 = vmatpush2.msra.mxu0 0.0
    %1086 = vmatprep.subr.mxu0 0.0
    %1087 = vmatpush2.msra.mxu0 0.0
    %1088 = vmatprep.subr.mxu0 0.0
    %1089 = vmatpush2.msra.mxu0 0.0
    %1090 = vmatprep.subr.mxu0 0.0
    %1091 = vmatpush2.msra.mxu0 0.0
    %1092 = vmatprep.subr.mxu0 0.0
    %1093 = vmatpush2.msra.mxu0 0.0
    %1094 = vmatprep.subr.mxu0 0.0
    %1095 = vmatpush2.msra.mxu0 0.0
    %1096 = vmatprep.subr.mxu0 0.0
    %1097 = vmatpush2.msra.mxu0 0.0
    %1098 = vmatprep.subr.mxu0 0.0
    %1099 = vmatpush2.msra.mxu0 0.0
    %1100 = vmatprep.subr.mxu0 0.0
    %1101 = vmatpush2.msra.mxu0 0.0
    %1102 = vmatprep.subr.mxu0 0.0
    %1103 = vmatpush2.msra.mxu0 0.0
    %1104 = vmatprep.subr.mxu0 0.0
    %1105 = vmatpush2.msra.mxu0 0.0
    %1106 = vmatprep.subr.mxu0 0.0
    %1107 = vmatpush2.msra.mxu0 0.0
    %1108 = vmatprep.subr.mxu0 0.0
    %1109 = vmatpush2.msra.mxu0 0.0
    %1110 = vmatprep.subr.mxu0 0.0
    %1111 = vmatpush2.msra.mxu0 0.0
    %1112 = vmatprep.mubr.f32.mxu0 0.0
    %1113 = vmatmul.mubr.f32.gmra.mxu0 %v1024
    %v1114 = vpop.f32.mrf.mxu0
    %v1115 = vadd.f32 0.0, %v1114
    %v1116 = vpop.f32.mrf.mxu0
    %1117 = vmatprep.mubr.f32.mxu0 0.0
    %1118 = vmatmul.mubr.f32.gmra.mxu0 %v1029
    %v1119 = vpop.f32.mrf.mxu0
    %v1120 = vadd.f32 0.0, %v1119
    %v1121 = vpop.f32.mrf.mxu0
    %1122 = vdwg.mxu0
    %1123 = vmatprep.subr.mxu0 0.0
    %1124 = vmatpush1.msra.mxu0 0.0
    %1125 = vmatprep.subr.mxu0 0.0
    %1126 = vmatpush1.msra.mxu0 0.0
    %1127 = vmatprep.subr.mxu0 0.0
    %1128 = vmatpush1.msra.mxu0 0.0
    %1129 = vmatprep.subr.mxu0 0.0
    %1130 = vmatpush1.msra.mxu0 0.0
    %1131 = vmatprep.subr.mxu0 0.0
    %1132 = vmatpush1.msra.mxu0 0.0
    %1133 = vmatprep.subr.mxu0 0.0
    %1134 = vmatpush1.msra.mxu0 0.0
    %1135 = vmatprep.subr.mxu0 0.0
    %1136 = vmatpush1.msra.mxu0 0.0
    %1137 = vmatprep.subr.mxu0 0.0
    %1138 = vmatpush1.msra.mxu0 0.0
    %1139 = vmatprep.subr.mxu0 0.0
    %1140 = vmatpush1.msra.mxu0 0.0
    %1141 = vmatprep.subr.mxu0 0.0
    %1142 = vmatpush1.msra.mxu0 0.0
    %1143 = vmatprep.subr.mxu0 0.0
    %1144 = vmatpush1.msra.mxu0 0.0
    %1145 = vmatprep.subr.mxu0 0.0
    %1146 = vmatpush1.msra.mxu0 0.0
    %1147 = vmatprep.subr.mxu0 0.0
    %1148 = vmatpush1.msra.mxu0 0.0
    %1149 = vmatprep.subr.mxu0 0.0
    %1150 = vmatpush1.msra.mxu0 0.0
    %1151 = vmatprep.subr.mxu0 0.0
    %1152 = vmatpush1.msra.mxu0 %v1029
    %1153 = vmatprep.subr.mxu0 0.0
    %1154 = vmatpush1.msra.mxu0 %v1024
    %1155 = vmatprep.subr.mxu0 0.0
    %1156 = vmatpush2.msra.mxu0 0.0
    %1157 = vmatprep.subr.mxu0 0.0
    %1158 = vmatpush2.msra.mxu0 0.0
    %1159 = vmatprep.subr.mxu0 0.0
    %1160 = vmatpush2.msra.mxu0 0.0
    %1161 = vmatprep.subr.mxu0 0.0
    %1162 = vmatpush2.msra.mxu0 0.0
    %1163 = vmatprep.subr.mxu0 0.0
    %1164 = vmatpush2.msra.mxu0 0.0
    %1165 = vmatprep.subr.mxu0 0.0
    %1166 = vmatpush2.msra.mxu0 0.0
    %1167 = vmatprep.subr.mxu0 0.0
    %1168 = vmatpush2.msra.mxu0 0.0
    %1169 = vmatprep.subr.mxu0 0.0
    %1170 = vmatpush2.msra.mxu0 0.0
    %1171 = vmatprep.subr.mxu0 0.0
    %1172 = vmatpush2.msra.mxu0 0.0
    %1173 = vmatprep.subr.mxu0 0.0
    %1174 = vmatpush2.msra.mxu0 0.0
    %1175 = vmatprep.subr.mxu0 0.0
    %1176 = vmatpush2.msra.mxu0 0.0
    %1177 = vmatprep.subr.mxu0 0.0
    %1178 = vmatpush2.msra.mxu0 0.0
    %1179 = vmatprep.subr.mxu0 0.0
    %1180 = vmatpush2.msra.mxu0 0.0
    %1181 = vmatprep.subr.mxu0 0.0
    %1182 = vmatpush2.msra.mxu0 0.0
    %1183 = vmatprep.subr.mxu0 0.0
    %1184 = vmatpush2.msra.mxu0 0.0
    %1185 = vmatprep.subr.mxu0 0.0
    %1186 = vmatpush2.msra.mxu0 0.0
    %1187 = vmatprep.mubr.f32.mxu0 0.0
    %1188 = vmatmul.mubr.f32.gmra.mxu0 %v306
    %v1189 = vpop.f32.mrf.mxu0
    %v1190 = vadd.f32 0.0, %v1189
    %v1191 = vpop.f32.mrf.mxu0
    %1192 = vmatprep.mubr.f32.mxu0 0.0
    %1193 = vmatmul.mubr.f32.gmra.mxu0 %v309
    %v1194 = vpop.f32.mrf.mxu0
    %v1195 = vadd.f32 0.0, %v1194
    %v1196 = vpop.f32.mrf.mxu0
    %1197 = vmatprep.mubr.f32.mxu0 0.0
    %1198 = vmatmul.mubr.f32.gmra.mxu0 %v312
    %v1199 = vpop.f32.mrf.mxu0
    %v1200 = vadd.f32 0.0, %v1199
    %v1201 = vpop.f32.mrf.mxu0
    %1202 = vmatprep.mubr.f32.mxu0 0.0
    %1203 = vmatmul.mubr.f32.gmra.mxu0 %v315
    %v1204 = vpop.f32.mrf.mxu0
    %v1205 = vadd.f32 0.0, %v1204
    %v1206 = vpop.f32.mrf.mxu0
    %1207 = vmatprep.mubr.f32.mxu0 0.0
    %1208 = vmatmul.mubr.f32.gmra.mxu0 %v318
    %v1209 = vpop.f32.mrf.mxu0
    %v1210 = vadd.f32 0.0, %v1209
    %v1211 = vpop.f32.mrf.mxu0
    %1212 = vmatprep.mubr.f32.mxu0 0.0
    %1213 = vmatmul.mubr.f32.gmra.mxu0 %v321
    %v1214 = vpop.f32.mrf.mxu0
    %v1215 = vadd.f32 0.0, %v1214
    %v1216 = vpop.f32.mrf.mxu0
    %1217 = vmatprep.mubr.f32.mxu0 0.0
    %1218 = vmatmul.mubr.f32.gmra.mxu0 %v324
    %v1219 = vpop.f32.mrf.mxu0
    %v1220 = vadd.f32 0.0, %v1219
    %v1221 = vpop.f32.mrf.mxu0
    %1222 = vmatprep.mubr.f32.mxu0 0.0
    %1223 = vmatmul.mubr.f32.gmra.mxu0 %v327
    %v1224 = vpop.f32.mrf.mxu0
    %v1225 = vadd.f32 0.0, %v1224
    %v1226 = vpop.f32.mrf.mxu0
    %1227 = vmatprep.mubr.f32.mxu0 0.0
    %1228 = vmatmul.mubr.f32.gmra.mxu0 %v330
    %v1229 = vpop.f32.mrf.mxu0
    %v1230 = vadd.f32 0.0, %v1229
    %v1231 = vpop.f32.mrf.mxu0
    %1232 = vmatprep.mubr.f32.mxu0 0.0
    %1233 = vmatmul.mubr.f32.gmra.mxu0 %v333
    %v1234 = vpop.f32.mrf.mxu0
    %v1235 = vadd.f32 0.0, %v1234
    %v1236 = vpop.f32.mrf.mxu0
    %1237 = vmatprep.mubr.f32.mxu0 0.0
    %1238 = vmatmul.mubr.f32.gmra.mxu0 %v336
    %v1239 = vpop.f32.mrf.mxu0
    %v1240 = vadd.f32 0.0, %v1239
    %v1241 = vpop.f32.mrf.mxu0
    %1242 = vmatprep.mubr.f32.mxu0 0.0
    %1243 = vmatmul.mubr.f32.gmra.mxu0 %v339
    %v1244 = vpop.f32.mrf.mxu0
    %v1245 = vadd.f32 0.0, %v1244
    %v1246 = vpop.f32.mrf.mxu0
    %1247 = vmatprep.mubr.f32.mxu0 0.0
    %1248 = vmatmul.mubr.f32.gmra.mxu0 %v342
    %v1249 = vpop.f32.mrf.mxu0
    %v1250 = vadd.f32 0.0, %v1249
    %v1251 = vpop.f32.mrf.mxu0
    %1252 = vmatprep.mubr.f32.mxu0 0.0
    %1253 = vmatmul.mubr.f32.gmra.mxu0 %v345
    %v1254 = vpop.f32.mrf.mxu0
    %v1255 = vadd.f32 0.0, %v1254
    %v1256 = vpop.f32.mrf.mxu0
    %1257 = vdwg.mxu0
    %v1258 = vld [vmem:[%s12] sm:$0xff]
    %1259 = vmatprep.subr.mxu0 0.0
    %1260 = vmatpush1.msra.mxu0 0.0
    %1261 = vmatprep.subr.mxu0 0.0
    %1262 = vmatpush1.msra.mxu0 0.0
    %1263 = vmatprep.subr.mxu0 0.0
    %1264 = vmatpush1.msra.mxu0 0.0
    %1265 = vmatprep.subr.mxu0 0.0
    %1266 = vmatpush1.msra.mxu0 0.0
    %1267 = vmatprep.subr.mxu0 0.0
    %1268 = vmatpush1.msra.mxu0 0.0
    %1269 = vmatprep.subr.mxu0 0.0
    %1270 = vmatpush1.msra.mxu0 0.0
    %1271 = vmatprep.subr.mxu0 0.0
    %1272 = vmatpush1.msra.mxu0 0.0
    %1273 = vmatprep.subr.mxu0 0.0
    %1274 = vmatpush1.msra.mxu0 0.0
    %1275 = vmatprep.subr.mxu0 0.0
    %1276 = vmatpush1.msra.mxu0 0.0
    %1277 = vmatprep.subr.mxu0 0.0
    %1278 = vmatpush1.msra.mxu0 0.0
    %1279 = vmatprep.subr.mxu0 0.0
    %1280 = vmatpush1.msra.mxu0 0.0
    %1281 = vmatprep.subr.mxu0 0.0
    %1282 = vmatpush1.msra.mxu0 0.0
    %1283 = vmatprep.subr.mxu0 0.0
    %1284 = vmatpush1.msra.mxu0 0.0
    %1285 = vmatprep.subr.mxu0 0.0
    %1286 = vmatpush1.msra.mxu0 0.0
    %1287 = vmatprep.subr.mxu0 0.0
    %1288 = vmatpush1.msra.mxu0 0.0
    %1289 = vmatprep.subr.mxu0 0.0
    %1290 = vmatpush1.msra.mxu0 %v1258
    %1291 = vmatprep.subr.mxu0 0.0
    %1292 = vmatpush2.msra.mxu0 0.0
    %1293 = vmatprep.subr.mxu0 0.0
    %1294 = vmatpush2.msra.mxu0 0.0
    %1295 = vmatprep.subr.mxu0 0.0
    %1296 = vmatpush2.msra.mxu0 0.0
    %1297 = vmatprep.subr.mxu0 0.0
    %1298 = vmatpush2.msra.mxu0 0.0
    %1299 = vmatprep.subr.mxu0 0.0
    %1300 = vmatpush2.msra.mxu0 0.0
    %1301 = vmatprep.subr.mxu0 0.0
    %1302 = vmatpush2.msra.mxu0 0.0
    %1303 = vmatprep.subr.mxu0 0.0
    %1304 = vmatpush2.msra.mxu0 0.0
    %1305 = vmatprep.subr.mxu0 0.0
    %1306 = vmatpush2.msra.mxu0 0.0
    %1307 = vmatprep.subr.mxu0 0.0
    %1308 = vmatpush2.msra.mxu0 0.0
    %1309 = vmatprep.subr.mxu0 0.0
    %1310 = vmatpush2.msra.mxu0 0.0
    %1311 = vmatprep.subr.mxu0 0.0
    %1312 = vmatpush2.msra.mxu0 0.0
    %1313 = vmatprep.subr.mxu0 0.0
    %1314 = vmatpush2.msra.mxu0 0.0
    %1315 = vmatprep.subr.mxu0 0.0
    %1316 = vmatpush2.msra.mxu0 0.0
    %1317 = vmatprep.subr.mxu0 0.0
    %1318 = vmatpush2.msra.mxu0 0.0
    %1319 = vmatprep.subr.mxu0 0.0
    %1320 = vmatpush2.msra.mxu0 0.0
    %1321 = vmatprep.subr.mxu0 0.0
    %1322 = vmatpush2.msra.mxu0 0.0
    %1323 = vmatprep.mubr.f32.mxu0 0.0
    %1324 = vmatmul.mubr.f32.gmra.mxu0 %v485
    %v1325 = vpop.f32.mrf.mxu0
    %v1326 = vadd.f32 0.0, %v1325
    %v1327 = vpop.f32.mrf.mxu0
    %1328 = vmatprep.mubr.f32.mxu0 0.0
    %1329 = vmatmul.mubr.f32.gmra.mxu0 %v488
    %v1330 = vpop.f32.mrf.mxu0
    %v1331 = vadd.f32 0.0, %v1330
    %v1332 = vpop.f32.mrf.mxu0
    %1333 = vmatprep.mubr.f32.mxu0 0.0
    %1334 = vmatmul.mubr.f32.gmra.mxu0 %v491
    %v1335 = vpop.f32.mrf.mxu0
    %v1336 = vadd.f32 0.0, %v1335
    %v1337 = vpop.f32.mrf.mxu0
    %1338 = vmatprep.mubr.f32.mxu0 0.0
    %1339 = vmatmul.mubr.f32.gmra.mxu0 %v494
    %v1340 = vpop.f32.mrf.mxu0
    %v1341 = vadd.f32 0.0, %v1340
    %v1342 = vpop.f32.mrf.mxu0
    %1343 = vmatprep.mubr.f32.mxu0 0.0
    %1344 = vmatmul.mubr.f32.gmra.mxu0 %v497
    %v1345 = vpop.f32.mrf.mxu0
    %v1346 = vadd.f32 0.0, %v1345
    %v1347 = vpop.f32.mrf.mxu0
    %1348 = vmatprep.mubr.f32.mxu0 0.0
    %1349 = vmatmul.mubr.f32.gmra.mxu0 %v500
    %v1350 = vpop.f32.mrf.mxu0
    %v1351 = vadd.f32 0.0, %v1350
    %v1352 = vpop.f32.mrf.mxu0
    %1353 = vmatprep.mubr.f32.mxu0 0.0
    %1354 = vmatmul.mubr.f32.gmra.mxu0 %v503
    %v1355 = vpop.f32.mrf.mxu0
    %v1356 = vadd.f32 0.0, %v1355
    %v1357 = vpop.f32.mrf.mxu0
    %1358 = vmatprep.mubr.f32.mxu0 0.0
    %1359 = vmatmul.mubr.f32.gmra.mxu0 %v506
    %v1360 = vpop.f32.mrf.mxu0
    %v1361 = vadd.f32 0.0, %v1360
    %v1362 = vpop.f32.mrf.mxu0
    %1363 = vmatprep.mubr.f32.mxu0 0.0
    %1364 = vmatmul.mubr.f32.gmra.mxu0 %v509
    %v1365 = vpop.f32.mrf.mxu0
    %v1366 = vadd.f32 0.0, %v1365
    %v1367 = vpop.f32.mrf.mxu0
    %1368 = vmatprep.mubr.f32.mxu0 0.0
    %1369 = vmatmul.mubr.f32.gmra.mxu0 %v512
    %v1370 = vpop.f32.mrf.mxu0
    %v1371 = vadd.f32 0.0, %v1370
    %v1372 = vpop.f32.mrf.mxu0
    %1373 = vmatprep.mubr.f32.mxu0 0.0
    %1374 = vmatmul.mubr.f32.gmra.mxu0 %v515
    %v1375 = vpop.f32.mrf.mxu0
    %v1376 = vadd.f32 0.0, %v1375
    %v1377 = vpop.f32.mrf.mxu0
    %1378 = vmatprep.mubr.f32.mxu0 0.0
    %1379 = vmatmul.mubr.f32.gmra.mxu0 %v518
    %v1380 = vpop.f32.mrf.mxu0
    %v1381 = vadd.f32 0.0, %v1380
    %v1382 = vpop.f32.mrf.mxu0
    %1383 = vmatprep.mubr.f32.mxu0 0.0
    %1384 = vmatmul.mubr.f32.gmra.mxu0 %v521
    %v1385 = vpop.f32.mrf.mxu0
    %v1386 = vadd.f32 0.0, %v1385
    %v1387 = vpop.f32.mrf.mxu0
    %1388 = vmatprep.mubr.f32.mxu0 0.0
    %1389 = vmatmul.mubr.f32.gmra.mxu0 %v524
    %v1390 = vpop.f32.mrf.mxu0
    %v1391 = vadd.f32 0.0, %v1390
    %v1392 = vpop.f32.mrf.mxu0
    %1393 = vdwg.mxu0
    %v1394 = vmul.f32 %v1190, %v1326
    %v1395 = vmul.f32 %v1195, %v1331
    %v1396 = vmul.f32 %v1200, %v1336
    %v1397 = vmul.f32 %v1205, %v1341
    %v1398 = vmul.f32 %v1210, %v1346
    %v1399 = vmul.f32 %v1215, %v1351
    %v1400 = vmul.f32 %v1220, %v1356
    %v1401 = vmul.f32 %v1225, %v1361
    %v1402 = vmul.f32 %v1230, %v1366
    %v1403 = vmul.f32 %v1235, %v1371
    %v1404 = vmul.f32 %v1240, %v1376
    %v1405 = vmul.f32 %v1245, %v1381
    %v1406 = vmul.f32 %v1250, %v1386
    %v1407 = vmul.f32 %v1255, %v1391
    %1408 = vmatprep.subr.mxu0 0.0
    %1409 = vmatpush1.msra.mxu0 0.0
    %1410 = vmatprep.subr.mxu0 0.0
    %1411 = vmatpush1.msra.mxu0 0.0
    %1412 = vmatprep.subr.mxu0 0.0
    %1413 = vmatpush1.msra.mxu0 %v1407
    %1414 = vmatprep.subr.mxu0 0.0
    %1415 = vmatpush1.msra.mxu0 %v1406
    %1416 = vmatprep.subr.mxu0 0.0
    %1417 = vmatpush1.msra.mxu0 %v1405
    %1418 = vmatprep.subr.mxu0 0.0
    %1419 = vmatpush1.msra.mxu0 %v1404
    %1420 = vmatprep.subr.mxu0 0.0
    %1421 = vmatpush1.msra.mxu0 %v1403
    %1422 = vmatprep.subr.mxu0 0.0
    %1423 = vmatpush1.msra.mxu0 %v1402
    %1424 = vmatprep.subr.mxu0 0.0
    %1425 = vmatpush1.msra.mxu0 %v1401
    %1426 = vmatprep.subr.mxu0 0.0
    %1427 = vmatpush1.msra.mxu0 %v1400
    %1428 = vmatprep.subr.mxu0 0.0
    %1429 = vmatpush1.msra.mxu0 %v1399
    %1430 = vmatprep.subr.mxu0 0.0
    %1431 = vmatpush1.msra.mxu0 %v1398
    %1432 = vmatprep.subr.mxu0 0.0
    %1433 = vmatpush1.msra.mxu0 %v1397
    %1434 = vmatprep.subr.mxu0 0.0
    %1435 = vmatpush1.msra.mxu0 %v1396
    %1436 = vmatprep.subr.mxu0 0.0
    %1437 = vmatpush1.msra.mxu0 %v1395
    %1438 = vmatprep.subr.mxu0 0.0
    %1439 = vmatpush1.msra.mxu0 %v1394
    %1440 = vmatprep.subr.mxu0 0.0
    %1441 = vmatpush2.msra.mxu0 0.0
    %1442 = vmatprep.subr.mxu0 0.0
    %1443 = vmatpush2.msra.mxu0 0.0
    %1444 = vmatprep.subr.mxu0 0.0
    %1445 = vmatpush2.msra.mxu0 0.0
    %1446 = vmatprep.subr.mxu0 0.0
    %1447 = vmatpush2.msra.mxu0 0.0
    %1448 = vmatprep.subr.mxu0 0.0
    %1449 = vmatpush2.msra.mxu0 0.0
    %1450 = vmatprep.subr.mxu0 0.0
    %1451 = vmatpush2.msra.mxu0 0.0
    %1452 = vmatprep.subr.mxu0 0.0
    %1453 = vmatpush2.msra.mxu0 0.0
    %1454 = vmatprep.subr.mxu0 0.0
    %1455 = vmatpush2.msra.mxu0 0.0
    %1456 = vmatprep.subr.mxu0 0.0
    %1457 = vmatpush2.msra.mxu0 0.0
    %1458 = vmatprep.subr.mxu0 0.0
    %1459 = vmatpush2.msra.mxu0 0.0
    %1460 = vmatprep.subr.mxu0 0.0
    %1461 = vmatpush2.msra.mxu0 0.0
    %1462 = vmatprep.subr.mxu0 0.0
    %1463 = vmatpush2.msra.mxu0 0.0
    %1464 = vmatprep.subr.mxu0 0.0
    %1465 = vmatpush2.msra.mxu0 0.0
    %1466 = vmatprep.subr.mxu0 0.0
    %1467 = vmatpush2.msra.mxu0 0.0
    %1468 = vmatprep.subr.mxu0 0.0
    %1469 = vmatpush2.msra.mxu0 0.0
    %1470 = vmatprep.subr.mxu0 0.0
    %1471 = vmatpush2.msra.mxu0 0.0
    %1472 = vmatprep.mubr.f32.mxu0 0.0
    %1473 = vmatmul.mubr.f32.gmra.mxu0 %v677
    %v1474 = vpop.f32.mrf.mxu0
    %v1475 = vadd.f32 0.0, %v1474
    %v1476 = vpop.f32.mrf.mxu0
    %1477 = vmatprep.mubr.f32.mxu0 0.0
    %1478 = vmatmul.mubr.f32.gmra.mxu0 %v680
    %v1479 = vpop.f32.mrf.mxu0
    %v1480 = vadd.f32 0.0, %v1479
    %v1481 = vpop.f32.mrf.mxu0
    %1482 = vdwg.mxu0
    %v1483 = vmul.f32 %v1475, 0.14285715
    %v1484 = vmul.f32 %v1480, 0.14285715
    %v1485 = vld [vmem:[%s13] sm:$0xff]
    %v1486 = vld [vmem:[%s13 + $0x8] sm:$0xff]
    %v1487 = vld [vmem:[%s13 + $0x10] sm:$0xff]
    %v1488 = vld [vmem:[%s13 + $0x18] sm:$0xff]
    %v1489 = vld [vmem:[%s13 + $0x20] sm:$0xff]
    %v1490 = vld [vmem:[%s13 + $0x28] sm:$0xff]
    %v1491 = vld [vmem:[%s13 + $0x30] sm:$0xff]
    %v1492 = vld [vmem:[%s13 + $0x38] sm:$0xff]
    %v1493 = vld [vmem:[%s13 + $0x40] sm:$0xff]
    %v1494 = vld [vmem:[%s13 + $0x48] sm:$0xff]
    %v1495 = vld [vmem:[%s13 + $0x50] sm:$0xff]
    %v1496 = vld [vmem:[%s13 + $0x58] sm:$0xff]
    %v1497 = vld [vmem:[%s13 + $0x60] sm:$0xff]
    %v1498 = vld [vmem:[%s13 + $0x68] sm:$0xff]
    %v1499 = vld [vmem:[%s13 + $0x70] sm:$0xff]
    %v1500 = vld [vmem:[%s13 + $0x78] sm:$0xff]
    %1501 = vmatprep.subr.mxu0 0.0
    %1502 = vmatpush1.msra.mxu0 %v1500
    %1503 = vmatprep.subr.mxu0 0.0
    %1504 = vmatpush1.msra.mxu0 %v1499
    %1505 = vmatprep.subr.mxu0 0.0
    %1506 = vmatpush1.msra.mxu0 %v1498
    %1507 = vmatprep.subr.mxu0 0.0
    %1508 = vmatpush1.msra.mxu0 %v1497
    %1509 = vmatprep.subr.mxu0 0.0
    %1510 = vmatpush1.msra.mxu0 %v1496
    %1511 = vmatprep.subr.mxu0 0.0
    %1512 = vmatpush1.msra.mxu0 %v1495
    %1513 = vmatprep.subr.mxu0 0.0
    %1514 = vmatpush1.msra.mxu0 %v1494
    %1515 = vmatprep.subr.mxu0 0.0
    %1516 = vmatpush1.msra.mxu0 %v1493
    %1517 = vmatprep.subr.mxu0 0.0
    %1518 = vmatpush1.msra.mxu0 %v1492
    %1519 = vmatprep.subr.mxu0 0.0
    %1520 = vmatpush1.msra.mxu0 %v1491
    %1521 = vmatprep.subr.mxu0 0.0
    %1522 = vmatpush1.msra.mxu0 %v1490
    %1523 = vmatprep.subr.mxu0 0.0
    %1524 = vmatpush1.msra.mxu0 %v1489
    %1525 = vmatprep.subr.mxu0 0.0
    %1526 = vmatpush1.msra.mxu0 %v1488
    %1527 = vmatprep.subr.mxu0 0.0
    %1528 = vmatpush1.msra.mxu0 %v1487
    %1529 = vmatprep.subr.mxu0 0.0
    %1530 = vmatpush1.msra.mxu0 %v1486
    %1531 = vmatprep.subr.mxu0 0.0
    %1532 = vmatpush1.msra.mxu0 %v1485
    %1533 = vmatprep.subr.mxu0 0.0
    %1534 = vmatpush2.msra.mxu0 0.0
    %1535 = vmatprep.subr.mxu0 0.0
    %1536 = vmatpush2.msra.mxu0 0.0
    %1537 = vmatprep.subr.mxu0 0.0
    %1538 = vmatpush2.msra.mxu0 0.0
    %1539 = vmatprep.subr.mxu0 0.0
    %1540 = vmatpush2.msra.mxu0 0.0
    %1541 = vmatprep.subr.mxu0 0.0
    %1542 = vmatpush2.msra.mxu0 0.0
    %1543 = vmatprep.subr.mxu0 0.0
    %1544 = vmatpush2.msra.mxu0 0.0
    %1545 = vmatprep.subr.mxu0 0.0
    %1546 = vmatpush2.msra.mxu0 0.0
    %1547 = vmatprep.subr.mxu0 0.0
    %1548 = vmatpush2.msra.mxu0 0.0
    %1549 = vmatprep.subr.mxu0 0.0
    %1550 = vmatpush2.msra.mxu0 0.0
    %1551 = vmatprep.subr.mxu0 0.0
    %1552 = vmatpush2.msra.mxu0 0.0
    %1553 = vmatprep.subr.mxu0 0.0
    %1554 = vmatpush2.msra.mxu0 0.0
    %1555 = vmatprep.subr.mxu0 0.0
    %1556 = vmatpush2.msra.mxu0 0.0
    %1557 = vmatprep.subr.mxu0 0.0
    %1558 = vmatpush2.msra.mxu0 0.0
    %1559 = vmatprep.subr.mxu0 0.0
    %1560 = vmatpush2.msra.mxu0 0.0
    %1561 = vmatprep.subr.mxu0 0.0
    %1562 = vmatpush2.msra.mxu0 0.0
    %1563 = vmatprep.subr.mxu0 0.0
    %1564 = vmatpush2.msra.mxu0 0.0
    %1565 = vmatprep.mubr.f32.mxu0 0.0
    %1566 = vmatmul.mubr.f32.gmra.mxu0 %v1483
    %v1567 = vpop.f32.mrf.mxu0
    %v1568 = vadd.f32 0.0, %v1567
    %v1569 = vpop.f32.mrf.mxu0
    %1570 = vmatprep.mubr.f32.mxu0 0.0
    %1571 = vmatmul.mubr.f32.gmra.mxu0 %v1484
    %v1572 = vpop.f32.mrf.mxu0
    %v1573 = vadd.f32 0.0, %v1572
    %v1574 = vpop.f32.mrf.mxu0
    %1575 = vdwg.mxu0
    %v1576 = vld [vmem:[%s14] sm:$0xff]
    %v1577 = vld [vmem:[%s14 + $0x8] sm:$0xff]
    %v1578 = vld [vmem:[%s14 + $0x10] sm:$0xff]
    %v1579 = vld [vmem:[%s14 + $0x18] sm:$0xff]
    %v1580 = vld [vmem:[%s14 + $0x20] sm:$0xff]
    %v1581 = vld [vmem:[%s14 + $0x28] sm:$0xff]
    %v1582 = vld [vmem:[%s14 + $0x30] sm:$0xff]
    %v1583 = vld [vmem:[%s14 + $0x38] sm:$0xff]
    %v1584 = vld [vmem:[%s14 + $0x40] sm:$0xff]
    %v1585 = vld [vmem:[%s14 + $0x48] sm:$0xff]
    %v1586 = vld [vmem:[%s14 + $0x50] sm:$0xff]
    %v1587 = vld [vmem:[%s14 + $0x58] sm:$0xff]
    %v1588 = vld [vmem:[%s14 + $0x60] sm:$0xff]
    %v1589 = vld [vmem:[%s14 + $0x68] sm:$0xff]
    %v1590 = vld [vmem:[%s14 + $0x70] sm:$0xff]
    %v1591 = vld [vmem:[%s14 + $0x78] sm:$0xff]
    %1592 = vmatprep.subr.mxu0 0.0
    %1593 = vmatpush1.msra.mxu0 %v1591
    %1594 = vmatprep.subr.mxu0 0.0
    %1595 = vmatpush1.msra.mxu0 %v1590
    %1596 = vmatprep.subr.mxu0 0.0
    %1597 = vmatpush1.msra.mxu0 %v1589
    %1598 = vmatprep.subr.mxu0 0.0
    %1599 = vmatpush1.msra.mxu0 %v1588
    %1600 = vmatprep.subr.mxu0 0.0
    %1601 = vmatpush1.msra.mxu0 %v1587
    %1602 = vmatprep.subr.mxu0 0.0
    %1603 = vmatpush1.msra.mxu0 %v1586
    %1604 = vmatprep.subr.mxu0 0.0
    %1605 = vmatpush1.msra.mxu0 %v1585
    %1606 = vmatprep.subr.mxu0 0.0
    %1607 = vmatpush1.msra.mxu0 %v1584
    %1608 = vmatprep.subr.mxu0 0.0
    %1609 = vmatpush1.msra.mxu0 %v1583
    %1610 = vmatprep.subr.mxu0 0.0
    %1611 = vmatpush1.msra.mxu0 %v1582
    %1612 = vmatprep.subr.mxu0 0.0
    %1613 = vmatpush1.msra.mxu0 %v1581
    %1614 = vmatprep.subr.mxu0 0.0
    %1615 = vmatpush1.msra.mxu0 %v1580
    %1616 = vmatprep.subr.mxu0 0.0
    %1617 = vmatpush1.msra.mxu0 %v1579
    %1618 = vmatprep.subr.mxu0 0.0
    %1619 = vmatpush1.msra.mxu0 %v1578
    %1620 = vmatprep.subr.mxu0 0.0
    %1621 = vmatpush1.msra.mxu0 %v1577
    %1622 = vmatprep.subr.mxu0 0.0
    %1623 = vmatpush1.msra.mxu0 %v1576
    %1624 = vmatprep.subr.mxu0 0.0
    %1625 = vmatpush2.msra.mxu0 0.0
    %1626 = vmatprep.subr.mxu0 0.0
    %1627 = vmatpush2.msra.mxu0 0.0
    %1628 = vmatprep.subr.mxu0 0.0
    %1629 = vmatpush2.msra.mxu0 0.0
    %1630 = vmatprep.subr.mxu0 0.0
    %1631 = vmatpush2.msra.mxu0 0.0
    %1632 = vmatprep.subr.mxu0 0.0
    %1633 = vmatpush2.msra.mxu0 0.0
    %1634 = vmatprep.subr.mxu0 0.0
    %1635 = vmatpush2.msra.mxu0 0.0
    %1636 = vmatprep.subr.mxu0 0.0
    %1637 = vmatpush2.msra.mxu0 0.0
    %1638 = vmatprep.subr.mxu0 0.0
    %1639 = vmatpush2.msra.mxu0 0.0
    %1640 = vmatprep.subr.mxu0 0.0
    %1641 = vmatpush2.msra.mxu0 0.0
    %1642 = vmatprep.subr.mxu0 0.0
    %1643 = vmatpush2.msra.mxu0 0.0
    %1644 = vmatprep.subr.mxu0 0.0
    %1645 = vmatpush2.msra.mxu0 0.0
    %1646 = vmatprep.subr.mxu0 0.0
    %1647 = vmatpush2.msra.mxu0 0.0
    %1648 = vmatprep.subr.mxu0 0.0
    %1649 = vmatpush2.msra.mxu0 0.0
    %1650 = vmatprep.subr.mxu0 0.0
    %1651 = vmatpush2.msra.mxu0 0.0
    %1652 = vmatprep.subr.mxu0 0.0
    %1653 = vmatpush2.msra.mxu0 0.0
    %1654 = vmatprep.subr.mxu0 0.0
    %1655 = vmatpush2.msra.mxu0 0.0
    %1656 = vmatprep.mubr.f32.mxu0 0.0
    %1657 = vmatmul.mubr.f32.gmra.mxu0 %v1024
    %v1658 = vpop.f32.mrf.mxu0
    %v1659 = vadd.f32 0.0, %v1658
    %v1660 = vpop.f32.mrf.mxu0
    %1661 = vmatprep.mubr.f32.mxu0 0.0
    %1662 = vmatmul.mubr.f32.gmra.mxu0 %v1029
    %v1663 = vpop.f32.mrf.mxu0
    %v1664 = vadd.f32 0.0, %v1663
    %v1665 = vpop.f32.mrf.mxu0
    %1666 = vdwg.mxu0
    %v1667 = vld [vmem:[#allocation5] sm:$0xff]
    %v1668 = vld [vmem:[#allocation5 + $0x8] sm:$0xff]
    %v1669 = vld [vmem:[#allocation5 + $0x10] sm:$0xff]
    %v1670 = vld [vmem:[#allocation5 + $0x18] sm:$0xff]
    %v1671 = vld [vmem:[#allocation5 + $0x20] sm:$0xff]
    %v1672 = vld [vmem:[#allocation5 + $0x28] sm:$0xff]
    %v1673 = vld [vmem:[#allocation5 + $0x30] sm:$0xff]
    %v1674 = vld [vmem:[#allocation5 + $0x38] sm:$0xff]
    %v1675 = vld [vmem:[#allocation5 + $0x40] sm:$0xff]
    %v1676 = vld [vmem:[#allocation5 + $0x48] sm:$0xff]
    %v1677 = vld [vmem:[#allocation5 + $0x50] sm:$0xff]
    %v1678 = vld [vmem:[#allocation5 + $0x58] sm:$0xff]
    %v1679 = vld [vmem:[#allocation5 + $0x60] sm:$0xff]
    %v1680 = vld [vmem:[#allocation5 + $0x68] sm:$0xff]
    %v1681 = vld [vmem:[#allocation5 + $0x70] sm:$0xff]
    %v1682 = vld [vmem:[#allocation5 + $0x78] sm:$0xff]
    %1683 = vmatprep.subr.mxu0 0.0
    %1684 = vmatpush1.msra.mxu0 %v1682
    %1685 = vmatprep.subr.mxu0 0.0
    %1686 = vmatpush1.msra.mxu0 %v1681
    %1687 = vmatprep.subr.mxu0 0.0
    %1688 = vmatpush1.msra.mxu0 %v1680
    %1689 = vmatprep.subr.mxu0 0.0
    %1690 = vmatpush1.msra.mxu0 %v1679
    %1691 = vmatprep.subr.mxu0 0.0
    %1692 = vmatpush1.msra.mxu0 %v1678
    %1693 = vmatprep.subr.mxu0 0.0
    %1694 = vmatpush1.msra.mxu0 %v1677
    %1695 = vmatprep.subr.mxu0 0.0
    %1696 = vmatpush1.msra.mxu0 %v1676
    %1697 = vmatprep.subr.mxu0 0.0
    %1698 = vmatpush1.msra.mxu0 %v1675
    %1699 = vmatprep.subr.mxu0 0.0
    %1700 = vmatpush1.msra.mxu0 %v1674
    %1701 = vmatprep.subr.mxu0 0.0
    %1702 = vmatpush1.msra.mxu0 %v1673
    %1703 = vmatprep.subr.mxu0 0.0
    %1704 = vmatpush1.msra.mxu0 %v1672
    %1705 = vmatprep.subr.mxu0 0.0
    %1706 = vmatpush1.msra.mxu0 %v1671
    %1707 = vmatprep.subr.mxu0 0.0
    %1708 = vmatpush1.msra.mxu0 %v1670
    %1709 = vmatprep.subr.mxu0 0.0
    %1710 = vmatpush1.msra.mxu0 %v1669
    %1711 = vmatprep.subr.mxu0 0.0
    %1712 = vmatpush1.msra.mxu0 %v1668
    %1713 = vmatprep.subr.mxu0 0.0
    %1714 = vmatpush1.msra.mxu0 %v1667
    %1715 = vmatprep.subr.mxu0 0.0
    %1716 = vmatpush2.msra.mxu0 0.0
    %1717 = vmatprep.subr.mxu0 0.0
    %1718 = vmatpush2.msra.mxu0 0.0
    %1719 = vmatprep.subr.mxu0 0.0
    %1720 = vmatpush2.msra.mxu0 0.0
    %1721 = vmatprep.subr.mxu0 0.0
    %1722 = vmatpush2.msra.mxu0 0.0
    %1723 = vmatprep.subr.mxu0 0.0
    %1724 = vmatpush2.msra.mxu0 0.0
    %1725 = vmatprep.subr.mxu0 0.0
    %1726 = vmatpush2.msra.mxu0 0.0
    %1727 = vmatprep.subr.mxu0 0.0
    %1728 = vmatpush2.msra.mxu0 0.0
    %1729 = vmatprep.subr.mxu0 0.0
    %1730 = vmatpush2.msra.mxu0 0.0
    %1731 = vmatprep.subr.mxu0 0.0
    %1732 = vmatpush2.msra.mxu0 0.0
    %1733 = vmatprep.subr.mxu0 0.0
    %1734 = vmatpush2.msra.mxu0 0.0
    %1735 = vmatprep.subr.mxu0 0.0
    %1736 = vmatpush2.msra.mxu0 0.0
    %1737 = vmatprep.subr.mxu0 0.0
    %1738 = vmatpush2.msra.mxu0 0.0
    %1739 = vmatprep.subr.mxu0 0.0
    %1740 = vmatpush2.msra.mxu0 0.0
    %1741 = vmatprep.subr.mxu0 0.0
    %1742 = vmatpush2.msra.mxu0 0.0
    %1743 = vmatprep.subr.mxu0 0.0
    %1744 = vmatpush2.msra.mxu0 0.0
    %1745 = vmatprep.subr.mxu0 0.0
    %1746 = vmatpush2.msra.mxu0 0.0
    %1747 = vmatprep.mubr.f32.mxu0 0.0
    %1748 = vmatmul.mubr.f32.gmra.mxu0 %v1568
    %v1749 = vpop.f32.mrf.mxu0
    %v1750 = vadd.f32 %v1659, %v1749
    %v1751 = vpop.f32.mrf.mxu0
    %1752 = vmatprep.mubr.f32.mxu0 0.0
    %1753 = vmatmul.mubr.f32.gmra.mxu0 %v1573
    %v1754 = vpop.f32.mrf.mxu0
    %v1755 = vadd.f32 %v1664, %v1754
    %v1756 = vpop.f32.mrf.mxu0
    %1757 = vdwg.mxu0
    %v1758 = vld [vmem:[#allocation7] sm:$0xff]
    %v1759 = vld [vmem:[#allocation7 + $0x8] sm:$0xff]
    %v1760 = vld [vmem:[#allocation7 + $0x10] sm:$0xff]
    %v1761 = vld [vmem:[#allocation7 + $0x18] sm:$0xff]
    %v1762 = vld [vmem:[#allocation7 + $0x20] sm:$0xff]
    %v1763 = vld [vmem:[#allocation7 + $0x28] sm:$0xff]
    %v1764 = vld [vmem:[#allocation7 + $0x30] sm:$0xff]
    %v1765 = vld [vmem:[#allocation7 + $0x38] sm:$0xff]
    %v1766 = vld [vmem:[#allocation7 + $0x40] sm:$0xff]
    %v1767 = vld [vmem:[#allocation7 + $0x48] sm:$0xff]
    %v1768 = vld [vmem:[#allocation7 + $0x50] sm:$0xff]
    %v1769 = vld [vmem:[#allocation7 + $0x58] sm:$0xff]
    %v1770 = vld [vmem:[#allocation7 + $0x60] sm:$0xff]
    %v1771 = vld [vmem:[#allocation7 + $0x68] sm:$0xff]
    %v1772 = vld [vmem:[#allocation7 + $0x70] sm:$0xff]
    %v1773 = vld [vmem:[#allocation7 + $0x78] sm:$0xff]
    %1774 = vmatprep.subr.mxu0 0.0
    %1775 = vmatpush1.msra.mxu0 %v1773
    %1776 = vmatprep.subr.mxu0 0.0
    %1777 = vmatpush1.msra.mxu0 %v1772
    %1778 = vmatprep.subr.mxu0 0.0
    %1779 = vmatpush1.msra.mxu0 %v1771
    %1780 = vmatprep.subr.mxu0 0.0
    %1781 = vmatpush1.msra.mxu0 %v1770
    %1782 = vmatprep.subr.mxu0 0.0
    %1783 = vmatpush1.msra.mxu0 %v1769
    %1784 = vmatprep.subr.mxu0 0.0
    %1785 = vmatpush1.msra.mxu0 %v1768
    %1786 = vmatprep.subr.mxu0 0.0
    %1787 = vmatpush1.msra.mxu0 %v1767
    %1788 = vmatprep.subr.mxu0 0.0
    %1789 = vmatpush1.msra.mxu0 %v1766
    %1790 = vmatprep.subr.mxu0 0.0
    %1791 = vmatpush1.msra.mxu0 %v1765
    %1792 = vmatprep.subr.mxu0 0.0
    %1793 = vmatpush1.msra.mxu0 %v1764
    %1794 = vmatprep.subr.mxu0 0.0
    %1795 = vmatpush1.msra.mxu0 %v1763
    %1796 = vmatprep.subr.mxu0 0.0
    %1797 = vmatpush1.msra.mxu0 %v1762
    %1798 = vmatprep.subr.mxu0 0.0
    %1799 = vmatpush1.msra.mxu0 %v1761
    %1800 = vmatprep.subr.mxu0 0.0
    %1801 = vmatpush1.msra.mxu0 %v1760
    %1802 = vmatprep.subr.mxu0 0.0
    %1803 = vmatpush1.msra.mxu0 %v1759
    %1804 = vmatprep.subr.mxu0 0.0
    %1805 = vmatpush1.msra.mxu0 %v1758
    %1806 = vmatprep.subr.mxu0 0.0
    %1807 = vmatpush2.msra.mxu0 0.0
    %1808 = vmatprep.subr.mxu0 0.0
    %1809 = vmatpush2.msra.mxu0 0.0
    %1810 = vmatprep.subr.mxu0 0.0
    %1811 = vmatpush2.msra.mxu0 0.0
    %1812 = vmatprep.subr.mxu0 0.0
    %1813 = vmatpush2.msra.mxu0 0.0
    %1814 = vmatprep.subr.mxu0 0.0
    %1815 = vmatpush2.msra.mxu0 0.0
    %1816 = vmatprep.subr.mxu0 0.0
    %1817 = vmatpush2.msra.mxu0 0.0
    %1818 = vmatprep.subr.mxu0 0.0
    %1819 = vmatpush2.msra.mxu0 0.0
    %1820 = vmatprep.subr.mxu0 0.0
    %1821 = vmatpush2.msra.mxu0 0.0
    %1822 = vmatprep.subr.mxu0 0.0
    %1823 = vmatpush2.msra.mxu0 0.0
    %1824 = vmatprep.subr.mxu0 0.0
    %1825 = vmatpush2.msra.mxu0 0.0
    %1826 = vmatprep.subr.mxu0 0.0
    %1827 = vmatpush2.msra.mxu0 0.0
    %1828 = vmatprep.subr.mxu0 0.0
    %1829 = vmatpush2.msra.mxu0 0.0
    %1830 = vmatprep.subr.mxu0 0.0
    %1831 = vmatpush2.msra.mxu0 0.0
    %1832 = vmatprep.subr.mxu0 0.0
    %1833 = vmatpush2.msra.mxu0 0.0
    %1834 = vmatprep.subr.mxu0 0.0
    %1835 = vmatpush2.msra.mxu0 0.0
    %1836 = vmatprep.subr.mxu0 0.0
    %1837 = vmatpush2.msra.mxu0 0.0
    %1838 = vmatprep.mubr.f32.mxu0 0.0
    %1839 = vmatmul.mubr.f32.gmra.mxu0 %v1750
    %v1840 = vpop.f32.mrf.mxu0
    %v1841 = vadd.f32 0.0, %v1840
    %v1842 = vpop.f32.mrf.mxu0
    %1843 = vmatprep.mubr.f32.mxu0 0.0
    %1844 = vmatmul.mubr.f32.gmra.mxu0 %v1755
    %v1845 = vpop.f32.mrf.mxu0
    %v1846 = vadd.f32 0.0, %v1845
    %v1847 = vpop.f32.mrf.mxu0
    %1848 = vdwg.mxu0
    %v1849 = vsub.f32 0.0, %v1841
    %v1850 = vsub.f32 0.0, %v1846
    %v1851 = vmul.f32 %v1849, 1.442695
    %v1852 = vpow.pop %v1851
    %v1853 = vmul.f32 %v1850, 1.442695
    %v1854 = vpow.pop %v1853
    %v1855 = vadd.f32 %v1852, 1.0
    %v1856 = vadd.f32 %v1854, 1.0
    %v1857 = vrcp.pop %v1855
    %v1858 = vmul.f32 1.0, %v1857
    %v1859 = vrcp.pop %v1856
    %v1860 = vmul.f32 1.0, %v1859
    %v1861 = vmul.f32 %v1841, %v1858
    %v1862 = vmul.f32 %v1846, %v1860
    %v1863 = vld [vmem:[%s18] sm:$0xff]
    %v1864 = vld [vmem:[%s18 + $0x8] sm:$0xff]
    %v1865 = vld [vmem:[%s18 + $0x10] sm:$0xff]
    %v1866 = vld [vmem:[%s18 + $0x18] sm:$0xff]
    %v1867 = vld [vmem:[%s18 + $0x20] sm:$0xff]
    %v1868 = vld [vmem:[%s18 + $0x28] sm:$0xff]
    %v1869 = vld [vmem:[%s18 + $0x30] sm:$0xff]
    %v1870 = vld [vmem:[%s18 + $0x38] sm:$0xff]
    %v1871 = vld [vmem:[%s18 + $0x40] sm:$0xff]
    %v1872 = vld [vmem:[%s18 + $0x48] sm:$0xff]
    %v1873 = vld [vmem:[%s18 + $0x50] sm:$0xff]
    %v1874 = vld [vmem:[%s18 + $0x58] sm:$0xff]
    %v1875 = vld [vmem:[%s18 + $0x60] sm:$0xff]
    %v1876 = vld [vmem:[%s18 + $0x68] sm:$0xff]
    %v1877 = vld [vmem:[%s18 + $0x70] sm:$0xff]
    %v1878 = vld [vmem:[%s18 + $0x78] sm:$0xff]
    %1879 = vmatprep.subr.mxu0 0.0
    %1880 = vmatpush1.msra.mxu0 %v1878
    %1881 = vmatprep.subr.mxu0 0.0
    %1882 = vmatpush1.msra.mxu0 %v1877
    %1883 = vmatprep.subr.mxu0 0.0
    %1884 = vmatpush1.msra.mxu0 %v1876
    %1885 = vmatprep.subr.mxu0 0.0
    %1886 = vmatpush1.msra.mxu0 %v1875
    %1887 = vmatprep.subr.mxu0 0.0
    %1888 = vmatpush1.msra.mxu0 %v1874
    %1889 = vmatprep.subr.mxu0 0.0
    %1890 = vmatpush1.msra.mxu0 %v1873
    %1891 = vmatprep.subr.mxu0 0.0
    %1892 = vmatpush1.msra.mxu0 %v1872
    %1893 = vmatprep.subr.mxu0 0.0
    %1894 = vmatpush1.msra.mxu0 %v1871
    %1895 = vmatprep.subr.mxu0 0.0
    %1896 = vmatpush1.msra.mxu0 %v1870
    %1897 = vmatprep.subr.mxu0 0.0
    %1898 = vmatpush1.msra.mxu0 %v1869
    %1899 = vmatprep.subr.mxu0 0.0
    %1900 = vmatpush1.msra.mxu0 %v1868
    %1901 = vmatprep.subr.mxu0 0.0
    %1902 = vmatpush1.msra.mxu0 %v1867
    %1903 = vmatprep.subr.mxu0 0.0
    %1904 = vmatpush1.msra.mxu0 %v1866
    %1905 = vmatprep.subr.mxu0 0.0
    %1906 = vmatpush1.msra.mxu0 %v1865
    %1907 = vmatprep.subr.mxu0 0.0
    %1908 = vmatpush1.msra.mxu0 %v1864
    %1909 = vmatprep.subr.mxu0 0.0
    %1910 = vmatpush1.msra.mxu0 %v1863
    %1911 = vmatprep.subr.mxu0 0.0
    %1912 = vmatpush2.msra.mxu0 0.0
    %1913 = vmatprep.subr.mxu0 0.0
    %1914 = vmatpush2.msra.mxu0 0.0
    %1915 = vmatprep.subr.mxu0 0.0
    %1916 = vmatpush2.msra.mxu0 0.0
    %1917 = vmatprep.subr.mxu0 0.0
    %1918 = vmatpush2.msra.mxu0 0.0
    %1919 = vmatprep.subr.mxu0 0.0
    %1920 = vmatpush2.msra.mxu0 0.0
    %1921 = vmatprep.subr.mxu0 0.0
    %1922 = vmatpush2.msra.mxu0 0.0
    %1923 = vmatprep.subr.mxu0 0.0
    %1924 = vmatpush2.msra.mxu0 0.0
    %1925 = vmatprep.subr.mxu0 0.0
    %1926 = vmatpush2.msra.mxu0 0.0
    %1927 = vmatprep.subr.mxu0 0.0
    %1928 = vmatpush2.msra.mxu0 0.0
    %1929 = vmatprep.subr.mxu0 0.0
    %1930 = vmatpush2.msra.mxu0 0.0
    %1931 = vmatprep.subr.mxu0 0.0
    %1932 = vmatpush2.msra.mxu0 0.0
    %1933 = vmatprep.subr.mxu0 0.0
    %1934 = vmatpush2.msra.mxu0 0.0
    %1935 = vmatprep.subr.mxu0 0.0
    %1936 = vmatpush2.msra.mxu0 0.0
    %1937 = vmatprep.subr.mxu0 0.0
    %1938 = vmatpush2.msra.mxu0 0.0
    %1939 = vmatprep.subr.mxu0 0.0
    %1940 = vmatpush2.msra.mxu0 0.0
    %1941 = vmatprep.subr.mxu0 0.0
    %1942 = vmatpush2.msra.mxu0 0.0
    %1943 = vmatprep.mubr.f32.mxu0 0.0
    %1944 = vmatmul.mubr.f32.gmra.mxu0 %v1861
    %v1945 = vpop.f32.mrf.mxu0
    %v1946 = vadd.f32 0.0, %v1945
    %v1947 = vpop.f32.mrf.mxu0
    %1948 = vmatprep.mubr.f32.mxu0 0.0
    %1949 = vmatmul.mubr.f32.gmra.mxu0 %v1862
    %v1950 = vpop.f32.mrf.mxu0
    %v1951 = vadd.f32 0.0, %v1950
    %v1952 = vpop.f32.mrf.mxu0
    %1953 = vdwg.mxu0
    %v1954 = vld [vmem:[%s7] sm:$0xff]
    %v1955 = vld [vmem:[%s7 + $0x8] sm:$0xff]
    %v1956 = vld [vmem:[%s7 + $0x10] sm:$0xff]
    %v1957 = vld [vmem:[%s7 + $0x18] sm:$0xff]
    %v1958 = vld [vmem:[%s7 + $0x20] sm:$0xff]
    %v1959 = vld [vmem:[%s7 + $0x28] sm:$0xff]
    %v1960 = vld [vmem:[%s7 + $0x30] sm:$0xff]
    %v1961 = vld [vmem:[%s7 + $0x38] sm:$0xff]
    %v1962 = vld [vmem:[%s7 + $0x40] sm:$0xff]
    %v1963 = vld [vmem:[%s7 + $0x48] sm:$0xff]
    %v1964 = vld [vmem:[%s7 + $0x50] sm:$0xff]
    %v1965 = vld [vmem:[%s7 + $0x58] sm:$0xff]
    %v1966 = vld [vmem:[%s7 + $0x60] sm:$0xff]
    %v1967 = vld [vmem:[%s7 + $0x68] sm:$0xff]
    %v1968 = vld [vmem:[%s7 + $0x70] sm:$0xff]
    %v1969 = vld [vmem:[%s7 + $0x78] sm:$0xff]
    %1970 = vmatprep.subr.mxu0 0.0
    %1971 = vmatpush1.msra.mxu0 %v1969
    %1972 = vmatprep.subr.mxu0 0.0
    %1973 = vmatpush1.msra.mxu0 %v1968
    %1974 = vmatprep.subr.mxu0 0.0
    %1975 = vmatpush1.msra.mxu0 %v1967
    %1976 = vmatprep.subr.mxu0 0.0
    %1977 = vmatpush1.msra.mxu0 %v1966
    %1978 = vmatprep.subr.mxu0 0.0
    %1979 = vmatpush1.msra.mxu0 %v1965
    %1980 = vmatprep.subr.mxu0 0.0
    %1981 = vmatpush1.msra.mxu0 %v1964
    %1982 = vmatprep.subr.mxu0 0.0
    %1983 = vmatpush1.msra.mxu0 %v1963
    %1984 = vmatprep.subr.mxu0 0.0
    %1985 = vmatpush1.msra.mxu0 %v1962
    %1986 = vmatprep.subr.mxu0 0.0
    %1987 = vmatpush1.msra.mxu0 %v1961
    %1988 = vmatprep.subr.mxu0 0.0
    %1989 = vmatpush1.msra.mxu0 %v1960
    %1990 = vmatprep.subr.mxu0 0.0
    %1991 = vmatpush1.msra.mxu0 %v1959
    %1992 = vmatprep.subr.mxu0 0.0
    %1993 = vmatpush1.msra.mxu0 %v1958
    %1994 = vmatprep.subr.mxu0 0.0
    %1995 = vmatpush1.msra.mxu0 %v1957
    %1996 = vmatprep.subr.mxu0 0.0
    %1997 = vmatpush1.msra.mxu0 %v1956
    %1998 = vmatprep.subr.mxu0 0.0
    %1999 = vmatpush1.msra.mxu0 %v1955
    %2000 = vmatprep.subr.mxu0 0.0
    %2001 = vmatpush1.msra.mxu0 %v1954
    %2002 = vmatprep.subr.mxu0 0.0
    %2003 = vmatpush2.msra.mxu0 0.0
    %2004 = vmatprep.subr.mxu0 0.0
    %2005 = vmatpush2.msra.mxu0 0.0
    %2006 = vmatprep.subr.mxu0 0.0
    %2007 = vmatpush2.msra.mxu0 0.0
    %2008 = vmatprep.subr.mxu0 0.0
    %2009 = vmatpush2.msra.mxu0 0.0
    %2010 = vmatprep.subr.mxu0 0.0
    %2011 = vmatpush2.msra.mxu0 0.0
    %2012 = vmatprep.subr.mxu0 0.0
    %2013 = vmatpush2.msra.mxu0 0.0
    %2014 = vmatprep.subr.mxu0 0.0
    %2015 = vmatpush2.msra.mxu0 0.0
    %2016 = vmatprep.subr.mxu0 0.0
    %2017 = vmatpush2.msra.mxu0 0.0
    %2018 = vmatprep.subr.mxu0 0.0
    %2019 = vmatpush2.msra.mxu0 0.0
    %2020 = vmatprep.subr.mxu0 0.0
    %2021 = vmatpush2.msra.mxu0 0.0
    %2022 = vmatprep.subr.mxu0 0.0
    %2023 = vmatpush2.msra.mxu0 0.0
    %2024 = vmatprep.subr.mxu0 0.0
    %2025 = vmatpush2.msra.mxu0 0.0
    %2026 = vmatprep.subr.mxu0 0.0
    %2027 = vmatpush2.msra.mxu0 0.0
    %2028 = vmatprep.subr.mxu0 0.0
    %2029 = vmatpush2.msra.mxu0 0.0
    %2030 = vmatprep.subr.mxu0 0.0
    %2031 = vmatpush2.msra.mxu0 0.0
    %2032 = vmatprep.subr.mxu0 0.0
    %2033 = vmatpush2.msra.mxu0 0.0
    %2034 = vmatprep.mubr.f32.mxu0 0.0
    %2035 = vmatmul.mubr.f32.gmra.mxu0 %v1750
    %v2036 = vpop.f32.mrf.mxu0
    %v2037 = vadd.f32 0.0, %v2036
    %v2038 = vpop.f32.mrf.mxu0
    %2039 = vmatprep.mubr.f32.mxu0 0.0
    %2040 = vmatmul.mubr.f32.gmra.mxu0 %v1755
    %v2041 = vpop.f32.mrf.mxu0
    %v2042 = vadd.f32 0.0, %v2041
    %v2043 = vpop.f32.mrf.mxu0
    %2044 = vdwg.mxu0
    %v2045 = vlaneseq
    %v2046 = vand.u32 %v2045, 127
    %vm2047 = vcmp.eq.s32.totalorder %v2046, 0
    %2049 = vset.pattern.permute.xlu0 0
    %2050 = vperm.xlu0 %2049, %v217
    %v2051 = vpop.permute.xlu0 %2050
    %2054 = vset.pattern.permute.xlu0 0
    %2055 = vperm.xlu0 %2054, %v222
    %v2056 = vpop.permute.xlu0 %2055
    %v2058 = vsel %vm2047, %v2051, 0.0
    %v2059 = vsel %vm2047, %v2056, 0.0
    %v2060 = vadd.f32 %v2058, 0.0
    %v2061 = vadd.f32 %v2059, 0.0
    %vm2062 = vcmp.eq.s32.totalorder %v2046, 1
    %2064 = vset.pattern.permute.xlu0 0
    %2065 = vperm.xlu0 %2064, %v1115
    %v2066 = vpop.permute.xlu0 %2065
    %2069 = vset.pattern.permute.xlu0 0
    %2070 = vperm.xlu0 %2069, %v1120
    %v2071 = vpop.permute.xlu0 %2070
    %v2073 = vsel %vm2062, %v2066, 0.0
    %v2074 = vsel %vm2062, %v2071, 0.0
    %v2075 = vadd.f32 %v2060, %v2073
    %v2076 = vadd.f32 %v2061, %v2074
    %vm2077 = vcmp.eq.s32.totalorder %v2046, 2
    %2079 = vset.pattern.permute.xlu0 0
    %2080 = vperm.xlu0 %2079, %v1946
    %v2081 = vpop.permute.xlu0 %2080
    %2084 = vset.pattern.permute.xlu0 0
    %2085 = vperm.xlu0 %2084, %v1951
    %v2086 = vpop.permute.xlu0 %2085
    %v2088 = vsel %vm2077, %v2081, 0.0
    %v2089 = vsel %vm2077, %v2086, 0.0
    %v2090 = vadd.f32 %v2075, %v2088
    %v2091 = vadd.f32 %v2076, %v2089
    %vm2092 = vcmp.eq.s32.totalorder %v2046, 3
    %2094 = vset.pattern.permute.xlu0 0
    %2095 = vperm.xlu0 %2094, %v2037
    %v2096 = vpop.permute.xlu0 %2095
    %2099 = vset.pattern.permute.xlu0 0
    %2100 = vperm.xlu0 %2099, %v2042
    %v2101 = vpop.permute.xlu0 %2100
    %v2103 = vsel %vm2092, %v2096, 0.0
    %v2104 = vsel %vm2092, %v2101, 0.0
    %v2105 = vadd.f32 %v2090, %v2103
    %v2106 = vadd.f32 %v2091, %v2104
    %2107 = vst [vmem:[#allocation8] sm:$0xff] %v1750
    %2108 = vst [vmem:[#allocation8 + $0x8] sm:$0xff] %v1755
    %2109 = vst [vmem:[#allocation9] sm:$0xff] %v2105
    %2110 = vst [vmem:[#allocation9 + $0x8] sm:$0xff] %v2106
    %v2111 = vld [vmem:[#allocation2] sm:$0x3]
    %v2113 = vsel %vm304, %v2111, 0
    %2115 = vmatprep.subr.mxu0 0.0
    %2116 = vmatpush1.msra.mxu0 0.0
    %2117 = vmatprep.subr.mxu0 0.0
    %2118 = vmatpush1.msra.mxu0 0.0
    %2119 = vmatprep.subr.mxu0 0.0
    %2120 = vmatpush1.msra.mxu0 0.0
    %2121 = vmatprep.subr.mxu0 0.0
    %2122 = vmatpush1.msra.mxu0 0.0
    %2123 = vmatprep.subr.mxu0 0.0
    %2124 = vmatpush1.msra.mxu0 0.0
    %2125 = vmatprep.subr.mxu0 0.0
    %2126 = vmatpush1.msra.mxu0 0.0
    %2127 = vmatprep.subr.mxu0 0.0
    %2128 = vmatpush1.msra.mxu0 0.0
    %2129 = vmatprep.subr.mxu0 0.0
    %2130 = vmatpush1.msra.mxu0 0.0
    %2131 = vmatprep.subr.mxu0 0.0
    %2132 = vmatpush1.msra.mxu0 0.0
    %2133 = vmatprep.subr.mxu0 0.0
    %2134 = vmatpush1.msra.mxu0 0.0
    %2135 = vmatprep.subr.mxu0 0.0
    %2136 = vmatpush1.msra.mxu0 0.0
    %2137 = vmatprep.subr.mxu0 0.0
    %2138 = vmatpush1.msra.mxu0 0.0
    %2139 = vmatprep.subr.mxu0 0.0
    %2140 = vmatpush1.msra.mxu0 0.0
    %2141 = vmatprep.subr.mxu0 0.0
    %2142 = vmatpush1.msra.mxu0 0.0
    %2143 = vmatprep.subr.mxu0 0.0
    %2144 = vmatpush1.msra.mxu0 %v2106
    %2145 = vmatprep.subr.mxu0 0.0
    %2146 = vmatpush1.msra.mxu0 %v2105
    %2147 = vmatprep.subr.mxu0 0.0
    %2148 = vmatpush2.msra.mxu0 0.0
    %2149 = vmatprep.subr.mxu0 0.0
    %2150 = vmatpush2.msra.mxu0 0.0
    %2151 = vmatprep.subr.mxu0 0.0
    %2152 = vmatpush2.msra.mxu0 0.0
    %2153 = vmatprep.subr.mxu0 0.0
    %2154 = vmatpush2.msra.mxu0 0.0
    %2155 = vmatprep.subr.mxu0 0.0
    %2156 = vmatpush2.msra.mxu0 0.0
    %2157 = vmatprep.subr.mxu0 0.0
    %2158 = vmatpush2.msra.mxu0 0.0
    %2159 = vmatprep.subr.mxu0 0.0
    %2160 = vmatpush2.msra.mxu0 0.0
    %2161 = vmatprep.subr.mxu0 0.0
    %2162 = vmatpush2.msra.mxu0 0.0
    %2163 = vmatprep.subr.mxu0 0.0
    %2164 = vmatpush2.msra.mxu0 0.0
    %2165 = vmatprep.subr.mxu0 0.0
    %2166 = vmatpush2.msra.mxu0 0.0
    %2167 = vmatprep.subr.mxu0 0.0
    %2168 = vmatpush2.msra.mxu0 0.0
    %2169 = vmatprep.subr.mxu0 0.0
    %2170 = vmatpush2.msra.mxu0 0.0
    %2171 = vmatprep.subr.mxu0 0.0
    %2172 = vmatpush2.msra.mxu0 0.0
    %2173 = vmatprep.subr.mxu0 0.0
    %2174 = vmatpush2.msra.mxu0 0.0
    %2175 = vmatprep.subr.mxu0 0.0
    %2176 = vmatpush2.msra.mxu0 0.0
    %2177 = vmatprep.subr.mxu0 0.0
    %2178 = vmatpush2.msra.mxu0 0.0
    %2179 = vmatprep.mubr.f32.mxu0 0.0
    %2180 = vmatmul.mubr.f32.gmra.mxu0 %v2113
    %v2181 = vpop.f32.mrf.mxu0
    %v2182 = vadd.f32 0.0, %v2181
    %v2183 = vpop.f32.mrf.mxu0
    %2184 = vdwg.mxu0
    %2185 = vst [vmem:[#allocation11] sm:$0x3] %v2182
    // Predicated region
    $region90: #{tpu_custom_call.1} parent=1 // pred_check
      _
    $region91: #{tpu_custom_call.1} parent=1 // pred_check_branch
      %2187 = sbr.rel (0) target = $region93
    $region92: #{tpu_custom_call.1} parent=1 // pred_region
      %s2189 = ssub.s32 256, 256
      %2190 = vsyncadd [#allocation4], %s2189
      %s2191 = sshll.u32 [#allocation8], 4
      %s2192 = int_to_ptr.vmem [resolvable:$true] %s2191
      %2197 = dma.vmem_to_hbm [thread:$0]  %s2192, 256, %s19, [#allocation4], 128, 128, 8
    $region93: #{tpu_custom_call.1} parent=1 // pred_fallthru
      _
    // Predicated region
    $region94: #{tpu_custom_call.1} parent=1 // pred_check
      _
    $region95: #{tpu_custom_call.1} parent=1 // pred_check_branch
      %2199 = sbr.rel (0) target = $region97
    $region96: #{tpu_custom_call.1} parent=1 // pred_region
      %s2201 = ssub.s32 256, 256
      %2202 = vsyncadd [#allocation10], %s2201
      %s2203 = sshll.u32 [#allocation9], 4
      %s2204 = int_to_ptr.vmem [resolvable:$true] %s2203
      %2209 = dma.vmem_to_hbm [thread:$0]  %s2204, 256, %s20, [#allocation10], 128, 128, 8
    $region97: #{tpu_custom_call.1} parent=1 // pred_fallthru
      _
    // Predicated region
    $region98: #{tpu_custom_call.1} parent=1 // pred_check
      _
    $region99: #{tpu_custom_call.1} parent=1 // pred_check_branch
      %2211 = sbr.rel (0) target = $region101
    $region100: #{tpu_custom_call.1} parent=1 // pred_region
      %s2213 = ssub.s32 32, 32
      %2214 = vsyncadd [#allocation10], %s2213
      %s2216 = sshll.u32 [#allocation11], 4
      %s2217 = int_to_ptr.vmem [resolvable:$true] %s2216
      %2219 = dma.vmem_to_hbm [thread:$0]  %s2217, 32, %s21, [#allocation10]
    $region101: #{tpu_custom_call.1} parent=1 // pred_fallthru
      _
    // Predicated region
    $region102: #{tpu_custom_call.1} parent=1 // pred_check
      _
    $region103: #{tpu_custom_call.1} parent=1 // pred_check_branch
      %2221 = sbr.rel (0) target = $region105
    $region104: #{tpu_custom_call.1} parent=1 // pred_region
      %2222 = dma.done [#allocation4], 256
    $region105: #{tpu_custom_call.1} parent=1 // pred_fallthru
      _
    // Predicated region
    $region106: #{tpu_custom_call.1} parent=1 // pred_check
      _
    $region107: #{tpu_custom_call.1} parent=1 // pred_check_branch
      %2224 = sbr.rel (0) target = $region109
    $region108: #{tpu_custom_call.1} parent=1 // pred_region
      %2225 = dma.done [#allocation10], 256
    $region109: #{tpu_custom_call.1} parent=1 // pred_fallthru
      _
    // Predicated region
    $region110: #{tpu_custom_call.1} parent=1 // pred_check
      _
    $region111: #{tpu_custom_call.1} parent=1 // pred_check_branch
      %2227 = sbr.rel (0) target = $region113
    $region112: #{tpu_custom_call.1} parent=1 // pred_region
      %2228 = dma.done [#allocation10], 32
    $region113: #{tpu_custom_call.1} parent=1 // pred_fallthru
      _
    %2229 = vsyncpa [#allocation3], 1
    %2230 = vsyncpa [#allocation6], 1
    %2231 = vsyncpa [#allocation4], 1
    %2232 = vsyncpa [#allocation10], 1

</llo_original>
